<compile_context>
chip_gen: v5e
topology: v5e:2x2
jax: 0.10.0
libtpu: 0.0.40
codegen_flags: <defaults>
</compile_context>

<pallas_src>
import functools

import jax
import jax.numpy as jnp
import numpy as np
from jax.experimental import pallas as pl
from jax.experimental.pallas import tpu as pltpu


def transition_block_kernel(x_ref, w1_ref, bn1b_ref, wf_ref, ssns_ref,
                            ssnb_ref, wt_ref, bn2b_ref, w2_ref, o_ref, *, F, T):
    """One batch block.  Rows = (sample, channel), lanes = flat f*T + t."""
    f32 = jnp.float32
    L = F * T

    x = x_ref[...]                                              # (NB*Cin, L)

    # --- conv1x1_1 (bn1 eval-scale pre-folded into the weight) + bias + ReLU ---
    h = jnp.dot(w1_ref[...], x, preferred_element_type=f32) + bn1b_ref[...]
    h = jnp.maximum(h, 0.0)                                     # (NB*C, L)

    # --- freq_dw_conv: depthwise (3,1) conv along F, zero pad 1 ---
    # In the flat f*T+t layout a +-1 frequency step is a +-T shift; realize it
    # as a matmul with a banded 0/1 matrix built from iota: no pad buffers, no
    # lane rotates, boundary zeros for free, data movement rides the idle MXU.
    row = jax.lax.broadcasted_iota(jnp.int32, (L, L), 0)
    col = jax.lax.broadcasted_iota(jnp.int32, (L, L), 1)
    shift_prev = (col - row == T).astype(f32)    # (h @ .)[:, l] = h[:, l - T]
    shift_next = (row - col == T).astype(f32)    # (h @ .)[:, l] = h[:, l + T]
    fd = (wf_ref[0] * jnp.dot(h, shift_prev, preferred_element_type=f32)
          + wf_ref[1] * h
          + wf_ref[2] * jnp.dot(h, shift_next, preferred_element_type=f32))

    # --- SubSpectralNorm (eval): per-(channel, frequency sub-band) affine ---
    aux = fd * ssns_ref[...] + ssnb_ref[...]                    # (NB*C, L)

    # Helper: 0/1 mask whose [i, j] entry is 1 where the flat index and the
    # time index agree modulo T.  Built with compares/ORs only (no integer
    # div/mod, which may not lower cleanly on the VPU).
    def time_match(shape, flat_axis, t_axis):
        flat = jax.lax.broadcasted_iota(jnp.int32, shape, flat_axis)
        t = jax.lax.broadcasted_iota(jnp.int32, shape, t_axis)
        diff = flat - t
        match = diff == 0
        for f in range(1, F):
            match = jnp.logical_or(match, diff == f * T)
        return match.astype(f32)

    # --- mean over F: sum via an (L, T) 0/1 map; the 1/F is folded into wt ---
    sum_mat = time_match((L, T), 0, 1)
    m = jnp.dot(aux, sum_mat, preferred_element_type=f32)       # (NB*C, T)

    # --- temp_dw_conv (1,3), pad 1, with bn2 scale + 1/F pre-folded into taps ---
    r2 = jax.lax.broadcasted_iota(jnp.int32, (T, T), 0)
    c2 = jax.lax.broadcasted_iota(jnp.int32, (T, T), 1)
    tprev = (c2 - r2 == 1).astype(f32)           # (m @ .)[:, t] = m[:, t - 1]
    tnext = (r2 - c2 == 1).astype(f32)           # (m @ .)[:, t] = m[:, t + 1]
    y = (wt_ref[0] * jnp.dot(m, tprev, preferred_element_type=f32)
         + wt_ref[1] * m
         + wt_ref[2] * jnp.dot(m, tnext, preferred_element_type=f32)
         + bn2b_ref[...])

    # --- SiLU ---
    y = y * jax.nn.sigmoid(y)

    # --- conv1x1_2 (block-diagonal over the batch block) ---
    y2 = jnp.dot(w2_ref[...], y, preferred_element_type=f32)    # (NB*C, T)

    # --- channel_drop (Dropout2d) is identity in eval; residual + ReLU ---
    # TODO(synk): train-mode Dropout2d / batch-stats BN are stochastic; eval semantics used.
    tile_mat = time_match((T, L), 1, 0)          # broadcast y2 back over F
    y2_full = jnp.dot(y2, tile_mat, preferred_element_type=f32)  # (NB*C, L)

    o_ref[...] = jnp.maximum(aux + y2_full, 0.0)


def transition_block(x_nchw, params, batch_block=None):
    """x_nchw: (N, Cin, F, T) float32. Returns (N, C, F, T)."""
    (w1, bn1s, bn1b, wf, ssns, ssnb, wt, bn2s, bn2b, w2) = params
    N, Cin, F, T = x_nchw.shape
    C = w1.shape[0]
    L = F * T
    dt = x_nchw.dtype

    # Batch blocking: one big block amortizes per-grid-step overhead (dominant
    # at small N); for N >= 4 use two parallel blocks so both TensorCores of a
    # megacore chip get work.
    if batch_block is None:
        batch_block = N if (N < 4 or N % 2 != 0) else N // 2
    NB = batch_block
    if N % NB != 0 or (NB != N and ((NB * Cin) % 8 != 0 or (NB * C) % 8 != 0)):
        NB = N                        # fall back to a single full-batch block
    nblk = N // NB
    R = NB * C

    # Free reshapes only — no HBM transposes.
    x2d = x_nchw.reshape(N * Cin, L)

    # 1x1 convs as block-diagonal matmuls over the batch block.
    # bn1's eval-mode scale folds into conv1x1_1; bn2's scale and the 1/F of
    # the frequency mean fold into the temporal depthwise taps (all linear).
    eye_nb = jnp.eye(NB, dtype=dt)
    w1_blk = jnp.kron(eye_nb, (bn1s[:, None] * w1).astype(dt))  # (NB*C, NB*Cin)
    w2_blk = jnp.kron(eye_nb, w2.astype(dt))                    # (NB*C, NB*C)
    wt_fold = (wt * bn2s[:, None]) / F                          # (C, 3)

    def per_row(v):                               # (C,) -> (NB*C, 1)
        return jnp.tile(v.astype(dt), (NB,)).reshape(R, 1)

    def per_row_taps(w):                          # (C, 3) -> (3, NB*C, 1)
        return jnp.tile(w.T.astype(dt), (1, NB)).reshape(3, R, 1)

    def per_row_freq(v):                          # (C, F) -> (NB*C, L)
        return jnp.tile(jnp.repeat(v.astype(dt), T, axis=1), (NB, 1))

    const_args = (w1_blk, per_row(bn1b), per_row_taps(wf),
                  per_row_freq(ssns), per_row_freq(ssnb),
                  per_row_taps(wt_fold), per_row(bn2b), w2_blk)

    def full_spec(a):
        nd = a.ndim
        return pl.BlockSpec(a.shape, lambda b, nd=nd: (0,) * nd)

    flops = int(2 * N * C * Cin * L           # conv1x1_1
                + 4 * N * C * L * L           # frequency-shift matmuls
                + 2 * N * C * L * T           # sum over F
                + 4 * N * C * T * T           # temporal-shift matmuls
                + 2 * N * C * C * T           # conv1x1_2
                + 2 * N * C * T * L           # broadcast over F
                + 8 * N * C * L)              # affines / relu / silu / residual
    bytes_accessed = int((x2d.size + N * C * L) * x2d.dtype.itemsize
                         + sum(int(a.size) * a.dtype.itemsize
                               for a in const_args))

    out2d = pl.pallas_call(
        functools.partial(transition_block_kernel, F=F, T=T),
        out_shape=jax.ShapeDtypeStruct((N * C, L), dt),
        grid=(nblk,),
        in_specs=[pl.BlockSpec((NB * Cin, L), lambda b: (b, 0))]
                 + [full_spec(a) for a in const_args],
        out_specs=pl.BlockSpec((R, L), lambda b: (b, 0)),
        compiler_params=pltpu.CompilerParams(
            dimension_semantics=("parallel",),
            vmem_limit_bytes=32 * 1024 * 1024),
        cost_estimate=pl.CostEstimate(flops=flops,
                                      transcendentals=int(N * C * T),
                                      bytes_accessed=bytes_accessed),
    )(x2d, *const_args)

    return out2d.reshape(N, C, F, T)


def make_params(key, inplanes, planes, F, S=5, eps=1e-5):
    """Deterministic synthetic parameters; BN folded into scale/shift (eval)."""
    C = planes
    ks = jax.random.split(key, 7)
    w1 = 0.2 * jax.random.normal(ks[0], (C, inplanes), jnp.float32)   # conv1x1_1
    wf = 0.3 * jax.random.normal(ks[1], (C, 3), jnp.float32)          # freq dw (3,1)
    wt = 0.3 * jax.random.normal(ks[2], (C, 3), jnp.float32)          # temp dw (1,3)
    w2 = 0.2 * jax.random.normal(ks[3], (C, C), jnp.float32)          # conv1x1_2

    def bn_affine(k, n):
        k1, k2, k3, k4 = jax.random.split(k, 4)
        gamma = 1.0 + 0.1 * jax.random.normal(k1, (n,), jnp.float32)
        beta = 0.1 * jax.random.normal(k2, (n,), jnp.float32)
        mean = 0.1 * jax.random.normal(k3, (n,), jnp.float32)
        var = jax.random.uniform(k4, (n,), jnp.float32, minval=0.5, maxval=1.5)
        scale = gamma / jnp.sqrt(var + eps)
        shift = beta - mean * scale
        return scale, shift

    bn1s, bn1b = bn_affine(ks[4], C)
    bn2s, bn2b = bn_affine(ks[5], C)
    ssn_s, ssn_b = bn_affine(ks[6], C * S)                 # BN over C*S channels
    sub = jnp.arange(F) // (F // S)                        # sub-band of each freq bin
    ssns = ssn_s.reshape(C, S)[:, sub]                     # (C, F)
    ssnb = ssn_b.reshape(C, S)[:, sub]
    return (w1, bn1s, bn1b, wf, ssns, ssnb, wt, bn2s, bn2b, w2)


def ref_forward(x, params):
    """Pure-JAX NCHW reference mirroring the PyTorch forward (eval mode)."""
    (w1, bn1s, bn1b, wf, ssns, ssnb, wt, bn2s, bn2b, w2) = params
    N, Cin, F, T = x.shape
    h = jnp.einsum('oc,ncft->noft', w1, x)
    h = h * bn1s[None, :, None, None] + bn1b[None, :, None, None]
    h = jnp.maximum(h, 0.0)
    hp = jnp.pad(h, ((0, 0), (0, 0), (1, 1), (0, 0)))
    fd = sum(wf[None, :, k, None, None] * hp[:, :, k:k + F, :] for k in range(3))
    aux = fd * ssns[None, :, :, None] + ssnb[None, :, :, None]
    m = aux.mean(axis=2, keepdims=True)
    mp = jnp.pad(m, ((0, 0), (0, 0), (0, 0), (1, 1)))
    td = sum(wt[None, :, k, None, None] * mp[:, :, :, k:k + T] for k in range(3))
    y = td * bn2s[None, :, None, None] + bn2b[None, :, None, None]
    y = y * jax.nn.sigmoid(y)
    y2 = jnp.einsum('oc,ncft->noft', w2, y)
    return jnp.maximum(aux + y2, 0.0)


if __name__ == "__main__":
    N, inplanes, planes, F, T = 2, 8, 16, 10, 16           # F divisible by S=5
    key = jax.random.PRNGKey(0)
    kx, kp = jax.random.split(key)
    x = jax.random.normal(kx, (N, inplanes, F, T), jnp.float32)
    params = make_params(kp, inplanes, planes, F)

    out = jax.block_until_ready(transition_block(x, params))

    ref = ref_forward(x, params)
    np.testing.assert_allclose(np.asarray(out), np.asarray(ref),
                               rtol=1e-4, atol=1e-4)
    print("KERNEL_OK")
</pallas_src>

<mosaic_0001>
module attributes {stable_mosaic.version = 11 : i64} {
  func.func @transition_block_kernel(%arg0: i32, %arg1: memref<16x160xf32, #tpu.memory_space<vmem>>, %arg2: memref<32x16xf32, #tpu.memory_space<vmem>>, %arg3: memref<32x1xf32, #tpu.memory_space<vmem>>, %arg4: memref<3x32x1xf32, #tpu.memory_space<vmem>>, %arg5: memref<32x160xf32, #tpu.memory_space<vmem>>, %arg6: memref<32x160xf32, #tpu.memory_space<vmem>>, %arg7: memref<3x32x1xf32, #tpu.memory_space<vmem>>, %arg8: memref<32x1xf32, #tpu.memory_space<vmem>>, %arg9: memref<32x32xf32, #tpu.memory_space<vmem>>, %arg10: memref<32x160xf32, #tpu.memory_space<vmem>>) attributes {dimension_semantics = [#tpu.dimension_semantics<parallel>], iteration_bounds = array<i64: 1>, scalar_prefetch = 0 : i64, scratch_operands = 0 : i64, tpu.core_type = #tpu.core_type<tc>, window_params = [{transform_indices = @transform_0, window_bounds = array<i64: 16, 160>}, {pipeline_mode = #tpu.pipeline_mode<synchronous>, transform_indices = @transform_1, window_bounds = array<i64: 32, 16>}, {pipeline_mode = #tpu.pipeline_mode<synchronous>, transform_indices = @transform_2, window_bounds = array<i64: 32, 1>}, {pipeline_mode = #tpu.pipeline_mode<synchronous>, transform_indices = @transform_3, window_bounds = array<i64: 3, 32, 1>}, {pipeline_mode = #tpu.pipeline_mode<synchronous>, transform_indices = @transform_4, window_bounds = array<i64: 32, 160>}, {pipeline_mode = #tpu.pipeline_mode<synchronous>, transform_indices = @transform_5, window_bounds = array<i64: 32, 160>}, {pipeline_mode = #tpu.pipeline_mode<synchronous>, transform_indices = @transform_6, window_bounds = array<i64: 3, 32, 1>}, {pipeline_mode = #tpu.pipeline_mode<synchronous>, transform_indices = @transform_7, window_bounds = array<i64: 32, 1>}, {pipeline_mode = #tpu.pipeline_mode<synchronous>, transform_indices = @transform_8, window_bounds = array<i64: 32, 32>}, {transform_indices = @transform_9, window_bounds = array<i64: 32, 160>}]} {
    %c0 = arith.constant 0 : index
    %c0_0 = arith.constant 0 : index
    %0 = vector.load %arg1[%c0, %c0_0] : memref<16x160xf32, #tpu.memory_space<vmem>>, vector<16x160xf32>
    %c0_1 = arith.constant 0 : index
    %c0_2 = arith.constant 0 : index
    %1 = vector.load %arg2[%c0_1, %c0_2] : memref<32x16xf32, #tpu.memory_space<vmem>>, vector<32x16xf32>
    %cst = arith.constant dense<0.000000e+00> : vector<32x160xf32>
    %2 = tpu.matmul %1, %0, %cst {dimension_numbers = #tpu.dot_dimension_numbers<[1], [0], [0], [1], [0, 0, 1, 1], [], []>} : vector<32x16xf32>, vector<16x160xf32>, vector<32x160xf32> -> vector<32x160xf32>
    %c0_3 = arith.constant 0 : index
    %c0_4 = arith.constant 0 : index
    %3 = vector.load %arg3[%c0_3, %c0_4] : memref<32x1xf32, #tpu.memory_space<vmem>>, vector<32x1xf32>
    %4 = vector.broadcast %3 : vector<32x1xf32> to vector<32x160xf32>
    %5 = arith.addf %2, %4 : vector<32x160xf32>
    %cst_5 = arith.constant 0.000000e+00 : f32
    %6 = vector.broadcast %cst_5 : f32 to vector<32x160xf32>
    %7 = arith.maximumf %5, %6 : vector<32x160xf32>
    %8 = tpu.iota {dimensions = array<i32: 0>} : vector<160x160xi32>
    %9 = tpu.iota {dimensions = array<i32: 1>} : vector<160x160xi32>
    %10 = arith.subi %9, %8 : vector<160x160xi32>
    %c16_i32 = arith.constant 16 : i32
    %11 = vector.broadcast %c16_i32 : i32 to vector<160x160xi32>
    %12 = arith.cmpi eq, %10, %11 : vector<160x160xi32>
    %13 = arith.extui %12 : vector<160x160xi1> to vector<160x160xi32>
    %14 = arith.sitofp %13 : vector<160x160xi32> to vector<160x160xf32>
    %15 = arith.subi %8, %9 : vector<160x160xi32>
    %c16_i32_6 = arith.constant 16 : i32
    %16 = vector.broadcast %c16_i32_6 : i32 to vector<160x160xi32>
    %17 = arith.cmpi eq, %15, %16 : vector<160x160xi32>
    %18 = arith.extui %17 : vector<160x160xi1> to vector<160x160xi32>
    %19 = arith.sitofp %18 : vector<160x160xi32> to vector<160x160xf32>
    %c0_7 = arith.constant 0 : index
    %c0_8 = arith.constant 0 : index
    %c0_9 = arith.constant 0 : index
    %20 = vector.load %arg4[%c0_7, %c0_8, %c0_9] : memref<3x32x1xf32, #tpu.memory_space<vmem>>, vector<1x32x1xf32>
    %21 = vector.shape_cast %20 : vector<1x32x1xf32> to vector<32x1xf32>
    %cst_10 = arith.constant dense<0.000000e+00> : vector<32x160xf32>
    %22 = tpu.matmul %7, %14, %cst_10 {dimension_numbers = #tpu.dot_dimension_numbers<[1], [0], [0], [1], [0, 0, 1, 1], [], []>} : vector<32x160xf32>, vector<160x160xf32>, vector<32x160xf32> -> vector<32x160xf32>
    %23 = vector.broadcast %21 : vector<32x1xf32> to vector<32x160xf32>
    %24 = arith.mulf %23, %22 : vector<32x160xf32>
    %c1 = arith.constant 1 : index
    %c0_11 = arith.constant 0 : index
    %c0_12 = arith.constant 0 : index
    %25 = vector.load %arg4[%c1, %c0_11, %c0_12] : memref<3x32x1xf32, #tpu.memory_space<vmem>>, vector<1x32x1xf32>
    %26 = vector.shape_cast %25 : vector<1x32x1xf32> to vector<32x1xf32>
    %27 = vector.broadcast %26 : vector<32x1xf32> to vector<32x160xf32>
    %28 = arith.mulf %27, %7 : vector<32x160xf32>
    %29 = arith.addf %24, %28 : vector<32x160xf32>
    %c2 = arith.constant 2 : index
    %c0_13 = arith.constant 0 : index
    %c0_14 = arith.constant 0 : index
    %30 = vector.load %arg4[%c2, %c0_13, %c0_14] : memref<3x32x1xf32, #tpu.memory_space<vmem>>, vector<1x32x1xf32>
    %31 = vector.shape_cast %30 : vector<1x32x1xf32> to vector<32x1xf32>
    %cst_15 = arith.constant dense<0.000000e+00> : vector<32x160xf32>
    %32 = tpu.matmul %7, %19, %cst_15 {dimension_numbers = #tpu.dot_dimension_numbers<[1], [0], [0], [1], [0, 0, 1, 1], [], []>} : vector<32x160xf32>, vector<160x160xf32>, vector<32x160xf32> -> vector<32x160xf32>
    %33 = vector.broadcast %31 : vector<32x1xf32> to vector<32x160xf32>
    %34 = arith.mulf %33, %32 : vector<32x160xf32>
    %35 = arith.addf %29, %34 : vector<32x160xf32>
    %c0_16 = arith.constant 0 : index
    %c0_17 = arith.constant 0 : index
    %36 = vector.load %arg5[%c0_16, %c0_17] : memref<32x160xf32, #tpu.memory_space<vmem>>, vector<32x160xf32>
    %37 = arith.mulf %35, %36 : vector<32x160xf32>
    %c0_18 = arith.constant 0 : index
    %c0_19 = arith.constant 0 : index
    %38 = vector.load %arg6[%c0_18, %c0_19] : memref<32x160xf32, #tpu.memory_space<vmem>>, vector<32x160xf32>
    %39 = arith.addf %37, %38 : vector<32x160xf32>
    %40 = tpu.iota {dimensions = array<i32: 0>} : vector<160x16xi32>
    %41 = tpu.iota {dimensions = array<i32: 1>} : vector<160x16xi32>
    %42 = arith.subi %40, %41 : vector<160x16xi32>
    %c0_i32 = arith.constant 0 : i32
    %43 = vector.broadcast %c0_i32 : i32 to vector<160x16xi32>
    %44 = arith.cmpi eq, %42, %43 : vector<160x16xi32>
    %c16_i32_20 = arith.constant 16 : i32
    %45 = vector.broadcast %c16_i32_20 : i32 to vector<160x16xi32>
    %46 = arith.cmpi eq, %42, %45 : vector<160x16xi32>
    %47 = arith.ori %44, %46 : vector<160x16xi1>
    %c32_i32 = arith.constant 32 : i32
    %48 = vector.broadcast %c32_i32 : i32 to vector<160x16xi32>
    %49 = arith.cmpi eq, %42, %48 : vector<160x16xi32>
    %50 = arith.ori %47, %49 : vector<160x16xi1>
    %c48_i32 = arith.constant 48 : i32
    %51 = vector.broadcast %c48_i32 : i32 to vector<160x16xi32>
    %52 = arith.cmpi eq, %42, %51 : vector<160x16xi32>
    %53 = arith.ori %50, %52 : vector<160x16xi1>
    %c64_i32 = arith.constant 64 : i32
    %54 = vector.broadcast %c64_i32 : i32 to vector<160x16xi32>
    %55 = arith.cmpi eq, %42, %54 : vector<160x16xi32>
    %56 = arith.ori %53, %55 : vector<160x16xi1>
    %c80_i32 = arith.constant 80 : i32
    %57 = vector.broadcast %c80_i32 : i32 to vector<160x16xi32>
    %58 = arith.cmpi eq, %42, %57 : vector<160x16xi32>
    %59 = arith.ori %56, %58 : vector<160x16xi1>
    %c96_i32 = arith.constant 96 : i32
    %60 = vector.broadcast %c96_i32 : i32 to vector<160x16xi32>
    %61 = arith.cmpi eq, %42, %60 : vector<160x16xi32>
    %62 = arith.ori %59, %61 : vector<160x16xi1>
    %c112_i32 = arith.constant 112 : i32
    %63 = vector.broadcast %c112_i32 : i32 to vector<160x16xi32>
    %64 = arith.cmpi eq, %42, %63 : vector<160x16xi32>
    %65 = arith.ori %62, %64 : vector<160x16xi1>
    %c128_i32 = arith.constant 128 : i32
    %66 = vector.broadcast %c128_i32 : i32 to vector<160x16xi32>
    %67 = arith.cmpi eq, %42, %66 : vector<160x16xi32>
    %68 = arith.ori %65, %67 : vector<160x16xi1>
    %c144_i32 = arith.constant 144 : i32
    %69 = vector.broadcast %c144_i32 : i32 to vector<160x16xi32>
    %70 = arith.cmpi eq, %42, %69 : vector<160x16xi32>
    %71 = arith.ori %68, %70 : vector<160x16xi1>
    %72 = arith.extui %71 : vector<160x16xi1> to vector<160x16xi32>
    %73 = arith.sitofp %72 : vector<160x16xi32> to vector<160x16xf32>
    %cst_21 = arith.constant dense<0.000000e+00> : vector<32x16xf32>
    %74 = tpu.matmul %39, %73, %cst_21 {dimension_numbers = #tpu.dot_dimension_numbers<[1], [0], [0], [1], [0, 0, 1, 1], [], []>} : vector<32x160xf32>, vector<160x16xf32>, vector<32x16xf32> -> vector<32x16xf32>
    %75 = tpu.iota {dimensions = array<i32: 0>} : vector<16x16xi32>
    %76 = tpu.iota {dimensions = array<i32: 1>} : vector<16x16xi32>
    %77 = arith.subi %76, %75 : vector<16x16xi32>
    %c1_i32 = arith.constant 1 : i32
    %78 = vector.broadcast %c1_i32 : i32 to vector<16x16xi32>
    %79 = arith.cmpi eq, %77, %78 : vector<16x16xi32>
    %80 = arith.extui %79 : vector<16x16xi1> to vector<16x16xi32>
    %81 = arith.sitofp %80 : vector<16x16xi32> to vector<16x16xf32>
    %82 = arith.subi %75, %76 : vector<16x16xi32>
    %c1_i32_22 = arith.constant 1 : i32
    %83 = vector.broadcast %c1_i32_22 : i32 to vector<16x16xi32>
    %84 = arith.cmpi eq, %82, %83 : vector<16x16xi32>
    %85 = arith.extui %84 : vector<16x16xi1> to vector<16x16xi32>
    %86 = arith.sitofp %85 : vector<16x16xi32> to vector<16x16xf32>
    %c0_23 = arith.constant 0 : index
    %c0_24 = arith.constant 0 : index
    %c0_25 = arith.constant 0 : index
    %87 = vector.load %arg7[%c0_23, %c0_24, %c0_25] : memref<3x32x1xf32, #tpu.memory_space<vmem>>, vector<1x32x1xf32>
    %88 = vector.shape_cast %87 : vector<1x32x1xf32> to vector<32x1xf32>
    %cst_26 = arith.constant dense<0.000000e+00> : vector<32x16xf32>
    %89 = tpu.matmul %74, %81, %cst_26 {dimension_numbers = #tpu.dot_dimension_numbers<[1], [0], [0], [1], [0, 0, 1, 1], [], []>} : vector<32x16xf32>, vector<16x16xf32>, vector<32x16xf32> -> vector<32x16xf32>
    %90 = vector.broadcast %88 : vector<32x1xf32> to vector<32x16xf32>
    %91 = arith.mulf %90, %89 : vector<32x16xf32>
    %c1_27 = arith.constant 1 : index
    %c0_28 = arith.constant 0 : index
    %c0_29 = arith.constant 0 : index
    %92 = vector.load %arg7[%c1_27, %c0_28, %c0_29] : memref<3x32x1xf32, #tpu.memory_space<vmem>>, vector<1x32x1xf32>
    %93 = vector.shape_cast %92 : vector<1x32x1xf32> to vector<32x1xf32>
    %94 = vector.broadcast %93 : vector<32x1xf32> to vector<32x16xf32>
    %95 = arith.mulf %94, %74 : vector<32x16xf32>
    %96 = arith.addf %91, %95 : vector<32x16xf32>
    %c2_30 = arith.constant 2 : index
    %c0_31 = arith.constant 0 : index
    %c0_32 = arith.constant 0 : index
    %97 = vector.load %arg7[%c2_30, %c0_31, %c0_32] : memref<3x32x1xf32, #tpu.memory_space<vmem>>, vector<1x32x1xf32>
    %98 = vector.shape_cast %97 : vector<1x32x1xf32> to vector<32x1xf32>
    %cst_33 = arith.constant dense<0.000000e+00> : vector<32x16xf32>
    %99 = tpu.matmul %74, %86, %cst_33 {dimension_numbers = #tpu.dot_dimension_numbers<[1], [0], [0], [1], [0, 0, 1, 1], [], []>} : vector<32x16xf32>, vector<16x16xf32>, vector<32x16xf32> -> vector<32x16xf32>
    %100 = vector.broadcast %98 : vector<32x1xf32> to vector<32x16xf32>
    %101 = arith.mulf %100, %99 : vector<32x16xf32>
    %102 = arith.addf %96, %101 : vector<32x16xf32>
    %c0_34 = arith.constant 0 : index
    %c0_35 = arith.constant 0 : index
    %103 = vector.load %arg8[%c0_34, %c0_35] : memref<32x1xf32, #tpu.memory_space<vmem>>, vector<32x1xf32>
    %104 = vector.broadcast %103 : vector<32x1xf32> to vector<32x16xf32>
    %105 = arith.addf %102, %104 : vector<32x16xf32>
    %106 = arith.negf %105 : vector<32x16xf32>
    %107 = math.exp %106 : vector<32x16xf32>
    %cst_36 = arith.constant 1.000000e+00 : f32
    %108 = vector.broadcast %cst_36 : f32 to vector<32x16xf32>
    %109 = arith.addf %108, %107 : vector<32x16xf32>
    %110 = arith.divf %108, %109 : vector<32x16xf32>
    %111 = arith.mulf %105, %110 : vector<32x16xf32>
    %c0_37 = arith.constant 0 : index
    %c0_38 = arith.constant 0 : index
    %112 = vector.load %arg9[%c0_37, %c0_38] : memref<32x32xf32, #tpu.memory_space<vmem>>, vector<32x32xf32>
    %cst_39 = arith.constant dense<0.000000e+00> : vector<32x16xf32>
    %113 = tpu.matmul %112, %111, %cst_39 {dimension_numbers = #tpu.dot_dimension_numbers<[1], [0], [0], [1], [0, 0, 1, 1], [], []>} : vector<32x32xf32>, vector<32x16xf32>, vector<32x16xf32> -> vector<32x16xf32>
    %114 = tpu.iota {dimensions = array<i32: 1>} : vector<16x160xi32>
    %115 = tpu.iota {dimensions = array<i32: 0>} : vector<16x160xi32>
    %116 = arith.subi %114, %115 : vector<16x160xi32>
    %c0_i32_40 = arith.constant 0 : i32
    %117 = vector.broadcast %c0_i32_40 : i32 to vector<16x160xi32>
    %118 = arith.cmpi eq, %116, %117 : vector<16x160xi32>
    %c16_i32_41 = arith.constant 16 : i32
    %119 = vector.broadcast %c16_i32_41 : i32 to vector<16x160xi32>
    %120 = arith.cmpi eq, %116, %119 : vector<16x160xi32>
    %121 = arith.ori %118, %120 : vector<16x160xi1>
    %c32_i32_42 = arith.constant 32 : i32
    %122 = vector.broadcast %c32_i32_42 : i32 to vector<16x160xi32>
    %123 = arith.cmpi eq, %116, %122 : vector<16x160xi32>
    %124 = arith.ori %121, %123 : vector<16x160xi1>
    %c48_i32_43 = arith.constant 48 : i32
    %125 = vector.broadcast %c48_i32_43 : i32 to vector<16x160xi32>
    %126 = arith.cmpi eq, %116, %125 : vector<16x160xi32>
    %127 = arith.ori %124, %126 : vector<16x160xi1>
    %c64_i32_44 = arith.constant 64 : i32
    %128 = vector.broadcast %c64_i32_44 : i32 to vector<16x160xi32>
    %129 = arith.cmpi eq, %116, %128 : vector<16x160xi32>
    %130 = arith.ori %127, %129 : vector<16x160xi1>
    %c80_i32_45 = arith.constant 80 : i32
    %131 = vector.broadcast %c80_i32_45 : i32 to vector<16x160xi32>
    %132 = arith.cmpi eq, %116, %131 : vector<16x160xi32>
    %133 = arith.ori %130, %132 : vector<16x160xi1>
    %c96_i32_46 = arith.constant 96 : i32
    %134 = vector.broadcast %c96_i32_46 : i32 to vector<16x160xi32>
    %135 = arith.cmpi eq, %116, %134 : vector<16x160xi32>
    %136 = arith.ori %133, %135 : vector<16x160xi1>
    %c112_i32_47 = arith.constant 112 : i32
    %137 = vector.broadcast %c112_i32_47 : i32 to vector<16x160xi32>
    %138 = arith.cmpi eq, %116, %137 : vector<16x160xi32>
    %139 = arith.ori %136, %138 : vector<16x160xi1>
    %c128_i32_48 = arith.constant 128 : i32
    %140 = vector.broadcast %c128_i32_48 : i32 to vector<16x160xi32>
    %141 = arith.cmpi eq, %116, %140 : vector<16x160xi32>
    %142 = arith.ori %139, %141 : vector<16x160xi1>
    %c144_i32_49 = arith.constant 144 : i32
    %143 = vector.broadcast %c144_i32_49 : i32 to vector<16x160xi32>
    %144 = arith.cmpi eq, %116, %143 : vector<16x160xi32>
    %145 = arith.ori %142, %144 : vector<16x160xi1>
    %146 = arith.extui %145 : vector<16x160xi1> to vector<16x160xi32>
    %147 = arith.sitofp %146 : vector<16x160xi32> to vector<16x160xf32>
    %cst_50 = arith.constant dense<0.000000e+00> : vector<32x160xf32>
    %148 = tpu.matmul %113, %147, %cst_50 {dimension_numbers = #tpu.dot_dimension_numbers<[1], [0], [0], [1], [0, 0, 1, 1], [], []>} : vector<32x16xf32>, vector<16x160xf32>, vector<32x160xf32> -> vector<32x160xf32>
    %149 = arith.addf %39, %148 : vector<32x160xf32>
    %cst_51 = arith.constant 0.000000e+00 : f32
    %150 = vector.broadcast %cst_51 : f32 to vector<32x160xf32>
    %151 = arith.maximumf %149, %150 : vector<32x160xf32>
    %c0_52 = arith.constant 0 : index
    %c0_53 = arith.constant 0 : index
    %152 = vector.load %arg10[%c0_52, %c0_53] : memref<32x160xf32, #tpu.memory_space<vmem>>, vector<32x160xf32>
    tpu.vector_store %arg10[%c0_52, %c0_53], %151 {strides = array<i32>} : memref<32x160xf32, #tpu.memory_space<vmem>>, vector<32x160xf32>,
    return
  }
  func.func @transform_0(%arg0: i32) -> (i32, i32) {
    %c0_i32 = arith.constant 0 : i32
    %c0_i32_0 = arith.constant 0 : i32
    return %arg0, %c0_i32 : i32, i32
  }
  func.func @transform_1(%arg0: i32) -> (i32, i32) {
    %c0_i32 = arith.constant 0 : i32
    %c0_i32_0 = arith.constant 0 : i32
    %c0_i32_1 = arith.constant 0 : i32
    return %c0_i32, %c0_i32_0 : i32, i32
  }
  func.func @transform_2(%arg0: i32) -> (i32, i32) {
    %c0_i32 = arith.constant 0 : i32
    %c0_i32_0 = arith.constant 0 : i32
    %c0_i32_1 = arith.constant 0 : i32
    return %c0_i32, %c0_i32_0 : i32, i32
  }
  func.func @transform_3(%arg0: i32) -> (i32, i32, i32) {
    %c0_i32 = arith.constant 0 : i32
    %c0_i32_0 = arith.constant 0 : i32
    %c0_i32_1 = arith.constant 0 : i32
    %c0_i32_2 = arith.constant 0 : i32
    return %c0_i32, %c0_i32_0, %c0_i32_1 : i32, i32, i32
  }
  func.func @transform_4(%arg0: i32) -> (i32, i32) {
    %c0_i32 = arith.constant 0 : i32
    %c0_i32_0 = arith.constant 0 : i32
    %c0_i32_1 = arith.constant 0 : i32
    return %c0_i32, %c0_i32_0 : i32, i32
  }
  func.func @transform_5(%arg0: i32) -> (i32, i32) {
    %c0_i32 = arith.constant 0 : i32
    %c0_i32_0 = arith.constant 0 : i32
    %c0_i32_1 = arith.constant 0 : i32
    return %c0_i32, %c0_i32_0 : i32, i32
  }
  func.func @transform_6(%arg0: i32) -> (i32, i32, i32) {
    %c0_i32 = arith.constant 0 : i32
    %c0_i32_0 = arith.constant 0 : i32
    %c0_i32_1 = arith.constant 0 : i32
    %c0_i32_2 = arith.constant 0 : i32
    return %c0_i32, %c0_i32_0, %c0_i32_1 : i32, i32, i32
  }
  func.func @transform_7(%arg0: i32) -> (i32, i32) {
    %c0_i32 = arith.constant 0 : i32
    %c0_i32_0 = arith.constant 0 : i32
    %c0_i32_1 = arith.constant 0 : i32
    return %c0_i32, %c0_i32_0 : i32, i32
  }
  func.func @transform_8(%arg0: i32) -> (i32, i32) {
    %c0_i32 = arith.constant 0 : i32
    %c0_i32_0 = arith.constant 0 : i32
    %c0_i32_1 = arith.constant 0 : i32
    return %c0_i32, %c0_i32_0 : i32, i32
  }
  func.func @transform_9(%arg0: i32) -> (i32, i32) {
    %c0_i32 = arith.constant 0 : i32
    %c0_i32_0 = arith.constant 0 : i32
    return %arg0, %c0_i32 : i32, i32
  }
}

</mosaic_0001>

<llo_original>
// kernel: tpu_custom_call.1
$region0: #{tpu_custom_call.1}
  #allocation0 [shape = 'u32[]', space=smem, size = 0x4, offset = 0x4, fixed_abs, tag = 'smem constant byte address 0x4 - core index']
  #allocation1 [shape = 'u32[72,128]{1,0:T(1,128)}', space=vmem, size = 0x9000, scoped, tag = 'internal scratch']
  %s0 = inlined_call_operand.vmem [shape: f32[16,160], index: 0, kind: input, shape index: {}]
  %s1 = inlined_call_operand.vmem [shape: f32[32,16], index: 1, kind: input, shape index: {}]
  %s2 = inlined_call_operand.vmem [shape: f32[32,1], index: 2, kind: input, shape index: {}]
  %s3 = inlined_call_operand.vmem [shape: f32[3,32,1], index: 3, kind: input, shape index: {}]
  %s4 = inlined_call_operand.vmem [shape: f32[32,160], index: 4, kind: input, shape index: {}]
  %s5 = inlined_call_operand.vmem [shape: f32[32,160], index: 5, kind: input, shape index: {}]
  %s6 = inlined_call_operand.vmem [shape: f32[3,32,1], index: 6, kind: input, shape index: {}]
  %s7 = inlined_call_operand.vmem [shape: f32[32,1], index: 7, kind: input, shape index: {}]
  %s8 = inlined_call_operand.vmem [shape: f32[32,32], index: 8, kind: input, shape index: {}]
  %s9 = inlined_call_operand.hbm [shape: f32[32,160], index: 9, kind: output, shape index: {}]
  %s10 = sld [smem:[#allocation0]]
  $region46: #{tpu_custom_call.1} parent=0
    _
  %s12 = ssub.s32 1, %s10
  %s13 = scalar_select 0, %s12, %s10
  $region1: #{tpu_custom_call.1} parent=0
    #allocation2 [shape = 'u8[32768]{0}', space=vmem, size = 0x8000, scoped, tag = 'output window, operand 0, single buffered']
    #allocation3 [shape = 's32[1]{0}', space=sflag, size = 0x4, scoped, tag = 'scoped memory for tpu_custom_call.1']
    %14 = vsyncpa [#allocation3], 0
    // Predicated region
    $region2: #{tpu_custom_call.1} parent=1 // pred_check
      _
    $region3: #{tpu_custom_call.1} parent=1 // pred_check_branch
      %16 = sbr.rel (0) target = $region5
    $region4: #{tpu_custom_call.1} parent=1 // pred_region
      _
    $region5: #{tpu_custom_call.1} parent=1 // pred_fallthru
      _
    // Predicated region
    $region6: #{tpu_custom_call.1} parent=1 // pred_check
      _
    $region7: #{tpu_custom_call.1} parent=1 // pred_check_branch
      %18 = sbr.rel (0) target = $region9
    $region8: #{tpu_custom_call.1} parent=1 // pred_region
      _
    $region9: #{tpu_custom_call.1} parent=1 // pred_fallthru
      _
    // Predicated region
    $region10: #{tpu_custom_call.1} parent=1 // pred_check
      _
    $region11: #{tpu_custom_call.1} parent=1 // pred_check_branch
      %20 = sbr.rel (0) target = $region13
    $region12: #{tpu_custom_call.1} parent=1 // pred_region
      _
    $region13: #{tpu_custom_call.1} parent=1 // pred_fallthru
      _
    // Predicated region
    $region14: #{tpu_custom_call.1} parent=1 // pred_check
      _
    $region15: #{tpu_custom_call.1} parent=1 // pred_check_branch
      %22 = sbr.rel (0) target = $region17
    $region16: #{tpu_custom_call.1} parent=1 // pred_region
      _
    $region17: #{tpu_custom_call.1} parent=1 // pred_fallthru
      _
    // Predicated region
    $region18: #{tpu_custom_call.1} parent=1 // pred_check
      _
    $region19: #{tpu_custom_call.1} parent=1 // pred_check_branch
      %24 = sbr.rel (0) target = $region21
    $region20: #{tpu_custom_call.1} parent=1 // pred_region
      _
    $region21: #{tpu_custom_call.1} parent=1 // pred_fallthru
      _
    // Predicated region
    $region22: #{tpu_custom_call.1} parent=1 // pred_check
      _
    $region23: #{tpu_custom_call.1} parent=1 // pred_check_branch
      %26 = sbr.rel (0) target = $region25
    $region24: #{tpu_custom_call.1} parent=1 // pred_region
      _
    $region25: #{tpu_custom_call.1} parent=1 // pred_fallthru
      _
    // Predicated region
    $region26: #{tpu_custom_call.1} parent=1 // pred_check
      _
    $region27: #{tpu_custom_call.1} parent=1 // pred_check_branch
      %28 = sbr.rel (0) target = $region29
    $region28: #{tpu_custom_call.1} parent=1 // pred_region
      _
    $region29: #{tpu_custom_call.1} parent=1 // pred_fallthru
      _
    // Predicated region
    $region30: #{tpu_custom_call.1} parent=1 // pred_check
      _
    $region31: #{tpu_custom_call.1} parent=1 // pred_check_branch
      %30 = sbr.rel (0) target = $region33
    $region32: #{tpu_custom_call.1} parent=1 // pred_region
      _
    $region33: #{tpu_custom_call.1} parent=1 // pred_fallthru
      _
    // Predicated region
    $region34: #{tpu_custom_call.1} parent=1 // pred_check
      _
    $region35: #{tpu_custom_call.1} parent=1 // pred_check_branch
      %32 = sbr.rel (0) target = $region37
    $region36: #{tpu_custom_call.1} parent=1 // pred_region
      _
    $region37: #{tpu_custom_call.1} parent=1 // pred_fallthru
      _
    %v33 = vld [vmem:[%s0] sm:$0xff]
    %v34 = vld [vmem:[%s0 + $0x8] sm:$0xff]
    %v35 = vld [vmem:[%s0 + $0x10] sm:$0xff]
    %v36 = vld [vmem:[%s0 + $0x18] sm:$0xff]
    %v37 = vld [vmem:[%s1] sm:$0xff]
    %v38 = vld [vmem:[%s1 + $0x8] sm:$0xff]
    %v39 = vld [vmem:[%s1 + $0x10] sm:$0xff]
    %v40 = vld [vmem:[%s1 + $0x18] sm:$0xff]
    %v41 = vld [vmem:[%s2] sm:$0xff]
    %v42 = vld [vmem:[%s2 + $0x8] sm:$0xff]
    %v43 = vld [vmem:[%s2 + $0x10] sm:$0xff]
    %v44 = vld [vmem:[%s2 + $0x18] sm:$0xff]
    %46 = vset.pattern.permute.xlu0 0
    %47 = vperm.xlu0 %46, %v41
    %v48 = vpop.permute.xlu0 %47
    %51 = vset.pattern.permute.xlu0 0
    %52 = vperm.xlu0 %51, %v42
    %v53 = vpop.permute.xlu0 %52
    %56 = vset.pattern.permute.xlu0 0
    %57 = vperm.xlu0 %56, %v43
    %v58 = vpop.permute.xlu0 %57
    %61 = vset.pattern.permute.xlu0 0
    %62 = vperm.xlu0 %61, %v44
    %v63 = vpop.permute.xlu0 %62
    %vm65 = vcmask 130048
    %v67 = vsel %vm65, %v37, 0
    %v70 = vsel %vm65, %v38, 0
    %v73 = vsel %vm65, %v39, 0
    %v76 = vsel %vm65, %v40, 0
    %78 = vmatpush.msra.mxu0 0.0
    %79 = vmatpush.msra.mxu0 0.0
    %80 = vmatpush.msra.mxu0 0.0
    %81 = vmatpush.msra.mxu0 0.0
    %82 = vmatpush.msra.mxu0 0.0
    %83 = vmatpush.msra.mxu0 0.0
    %84 = vmatpush.msra.mxu0 0.0
    %85 = vmatpush.msra.mxu0 0.0
    %86 = vmatpush.msra.mxu0 0.0
    %87 = vmatpush.msra.mxu0 0.0
    %88 = vmatpush.msra.mxu0 0.0
    %89 = vmatpush.msra.mxu0 0.0
    %90 = vmatpush.msra.mxu0 0.0
    %91 = vmatpush.msra.mxu0 0.0
    %92 = vmatpush.msra.mxu0 %v35
    %93 = vmatpush.msra.mxu0 %v33
    %94 = vmatmul.f32.gmra.mxu0 %v67
    %v95 = vpop.f32.mrf.mxu0
    %v96 = vadd.f32 %v48, %v95
    %97 = vmatmul.f32.gmra.mxu0 %v70
    %v98 = vpop.f32.mrf.mxu0
    %v99 = vadd.f32 %v53, %v98
    %100 = vmatmul.f32.gmra.mxu0 %v73
    %v101 = vpop.f32.mrf.mxu0
    %v102 = vadd.f32 %v58, %v101
    %103 = vmatmul.f32.gmra.mxu0 %v76
    %v104 = vpop.f32.mrf.mxu0
    %v105 = vadd.f32 %v63, %v104
    %106 = vdwg.mxu0
    %107 = vmatpush.msra.mxu0 0.0
    %108 = vmatpush.msra.mxu0 0.0
    %109 = vmatpush.msra.mxu0 0.0
    %110 = vmatpush.msra.mxu0 0.0
    %111 = vmatpush.msra.mxu0 0.0
    %112 = vmatpush.msra.mxu0 0.0
    %113 = vmatpush.msra.mxu0 0.0
    %114 = vmatpush.msra.mxu0 0.0
    %115 = vmatpush.msra.mxu0 0.0
    %116 = vmatpush.msra.mxu0 0.0
    %117 = vmatpush.msra.mxu0 0.0
    %118 = vmatpush.msra.mxu0 0.0
    %119 = vmatpush.msra.mxu0 0.0
    %120 = vmatpush.msra.mxu0 0.0
    %121 = vmatpush.msra.mxu0 %v36
    %122 = vmatpush.msra.mxu0 %v34
    %123 = vmatmul.f32.gmra.mxu0 %v67
    %v124 = vpop.f32.mrf.mxu0
    %v125 = vadd.f32 %v48, %v124
    %126 = vmatmul.f32.gmra.mxu0 %v70
    %v127 = vpop.f32.mrf.mxu0
    %v128 = vadd.f32 %v53, %v127
    %129 = vmatmul.f32.gmra.mxu0 %v73
    %v130 = vpop.f32.mrf.mxu0
    %v131 = vadd.f32 %v58, %v130
    %132 = vmatmul.f32.gmra.mxu0 %v76
    %v133 = vpop.f32.mrf.mxu0
    %v134 = vadd.f32 %v63, %v133
    %135 = vdwg.mxu0
    %v136 = vmax.f32 %v96, 0.0
    %v137 = vmax.f32 %v125, 0.0
    %v138 = vmax.f32 %v99, 0.0
    %v139 = vmax.f32 %v128, 0.0
    %v140 = vmax.f32 %v102, 0.0
    %v141 = vmax.f32 %v131, 0.0
    %v142 = vmax.f32 %v105, 0.0
    %v143 = vmax.f32 %v134, 0.0
    %v144 = vlaneseq
    %v145 = vshrl.u32 %v144, 7
    %v146 = vadd.s32 %v145, 8
    %v147 = vadd.s32 %v145, 16
    %v148 = vadd.s32 %v145, 24
    %v149 = vadd.s32 %v145, 32
    %v150 = vadd.s32 %v145, 40
    %v151 = vadd.s32 %v145, 48
    %v152 = vadd.s32 %v145, 56
    %v153 = vadd.s32 %v145, 64
    %v154 = vadd.s32 %v145, 72
    %v155 = vadd.s32 %v145, 80
    %v156 = vadd.s32 %v145, 88
    %v157 = vadd.s32 %v145, 96
    %v158 = vadd.s32 %v145, 104
    %v159 = vadd.s32 %v145, 112
    %v160 = vadd.s32 %v145, 120
    %v161 = vadd.s32 %v145, 128
    %v162 = vadd.s32 %v145, 136
    %v163 = vadd.s32 %v145, 144
    %v164 = vadd.s32 %v145, 152
    %v165 = vlaneseq
    %v166 = vand.u32 %v165, 127
    %v167 = vadd.s32 %v166, 128
    %v168 = vsub.s32 %v166, %v145
    %v169 = vsub.s32 %v167, %v145
    %v170 = vsub.s32 %v166, %v146
    %v171 = vsub.s32 %v167, %v146
    %v172 = vsub.s32 %v166, %v147
    %v173 = vsub.s32 %v167, %v147
    %v174 = vsub.s32 %v166, %v148
    %v175 = vsub.s32 %v167, %v148
    %v176 = vsub.s32 %v166, %v149
    %v177 = vsub.s32 %v167, %v149
    %v178 = vsub.s32 %v166, %v150
    %v179 = vsub.s32 %v167, %v150
    %v180 = vsub.s32 %v166, %v151
    %v181 = vsub.s32 %v167, %v151
    %v182 = vsub.s32 %v166, %v152
    %v183 = vsub.s32 %v167, %v152
    %v184 = vsub.s32 %v166, %v153
    %v185 = vsub.s32 %v167, %v153
    %v186 = vsub.s32 %v166, %v154
    %v187 = vsub.s32 %v167, %v154
    %v188 = vsub.s32 %v166, %v155
    %v189 = vsub.s32 %v167, %v155
    %v190 = vsub.s32 %v166, %v156
    %v191 = vsub.s32 %v167, %v156
    %v192 = vsub.s32 %v166, %v157
    %v193 = vsub.s32 %v167, %v157
    %v194 = vsub.s32 %v166, %v158
    %v195 = vsub.s32 %v167, %v158
    %v196 = vsub.s32 %v166, %v159
    %v197 = vsub.s32 %v167, %v159
    %v198 = vsub.s32 %v166, %v160
    %v199 = vsub.s32 %v167, %v160
    %v200 = vsub.s32 %v166, %v161
    %v201 = vsub.s32 %v167, %v161
    %v202 = vsub.s32 %v166, %v162
    %v203 = vsub.s32 %v167, %v162
    %v204 = vsub.s32 %v166, %v163
    %v205 = vsub.s32 %v167, %v163
    %v206 = vsub.s32 %v166, %v164
    %v207 = vsub.s32 %v167, %v164
    %vm208 = vcmp.eq.s32.totalorder %v168, 16
    %vm209 = vcmp.eq.s32.totalorder %v169, 16
    %vm210 = vcmp.eq.s32.totalorder %v170, 16
    %vm211 = vcmp.eq.s32.totalorder %v171, 16
    %vm212 = vcmp.eq.s32.totalorder %v172, 16
    %vm213 = vcmp.eq.s32.totalorder %v173, 16
    %vm214 = vcmp.eq.s32.totalorder %v174, 16
    %vm215 = vcmp.eq.s32.totalorder %v175, 16
    %vm216 = vcmp.eq.s32.totalorder %v176, 16
    %vm217 = vcmp.eq.s32.totalorder %v177, 16
    %vm218 = vcmp.eq.s32.totalorder %v178, 16
    %vm219 = vcmp.eq.s32.totalorder %v179, 16
    %vm220 = vcmp.eq.s32.totalorder %v180, 16
    %vm221 = vcmp.eq.s32.totalorder %v181, 16
    %vm222 = vcmp.eq.s32.totalorder %v182, 16
    %vm223 = vcmp.eq.s32.totalorder %v183, 16
    %vm224 = vcmp.eq.s32.totalorder %v184, 16
    %vm225 = vcmp.eq.s32.totalorder %v185, 16
    %vm226 = vcmp.eq.s32.totalorder %v186, 16
    %vm227 = vcmp.eq.s32.totalorder %v187, 16
    %vm228 = vcmp.eq.s32.totalorder %v188, 16
    %vm229 = vcmp.eq.s32.totalorder %v189, 16
    %vm230 = vcmp.eq.s32.totalorder %v190, 16
    %vm231 = vcmp.eq.s32.totalorder %v191, 16
    %vm232 = vcmp.eq.s32.totalorder %v192, 16
    %vm233 = vcmp.eq.s32.totalorder %v193, 16
    %vm234 = vcmp.eq.s32.totalorder %v194, 16
    %vm235 = vcmp.eq.s32.totalorder %v195, 16
    %vm236 = vcmp.eq.s32.totalorder %v196, 16
    %vm237 = vcmp.eq.s32.totalorder %v197, 16
    %vm238 = vcmp.eq.s32.totalorder %v198, 16
    %vm239 = vcmp.eq.s32.totalorder %v199, 16
    %vm240 = vcmp.eq.s32.totalorder %v200, 16
    %vm241 = vcmp.eq.s32.totalorder %v201, 16
    %vm242 = vcmp.eq.s32.totalorder %v202, 16
    %vm243 = vcmp.eq.s32.totalorder %v203, 16
    %vm244 = vcmp.eq.s32.totalorder %v204, 16
    %vm245 = vcmp.eq.s32.totalorder %v205, 16
    %vm246 = vcmp.eq.s32.totalorder %v206, 16
    %vm247 = vcmp.eq.s32.totalorder %v207, 16
    %v248 = vsel %vm208, 1, 0
    %v249 = vsel %vm209, 1, 0
    %v250 = vsel %vm210, 1, 0
    %v251 = vsel %vm211, 1, 0
    %v252 = vsel %vm212, 1, 0
    %v253 = vsel %vm213, 1, 0
    %v254 = vsel %vm214, 1, 0
    %v255 = vsel %vm215, 1, 0
    %v256 = vsel %vm216, 1, 0
    %v257 = vsel %vm217, 1, 0
    %v258 = vsel %vm218, 1, 0
    %v259 = vsel %vm219, 1, 0
    %v260 = vsel %vm220, 1, 0
    %v261 = vsel %vm221, 1, 0
    %v262 = vsel %vm222, 1, 0
    %v263 = vsel %vm223, 1, 0
    %v264 = vsel %vm224, 1, 0
    %v265 = vsel %vm225, 1, 0
    %v266 = vsel %vm226, 1, 0
    %v267 = vsel %vm227, 1, 0
    %v268 = vsel %vm228, 1, 0
    %v269 = vsel %vm229, 1, 0
    %v270 = vsel %vm230, 1, 0
    %v271 = vsel %vm231, 1, 0
    %v272 = vsel %vm232, 1, 0
    %v273 = vsel %vm233, 1, 0
    %v274 = vsel %vm234, 1, 0
    %v275 = vsel %vm235, 1, 0
    %v276 = vsel %vm236, 1, 0
    %v277 = vsel %vm237, 1, 0
    %v278 = vsel %vm238, 1, 0
    %v279 = vsel %vm239, 1, 0
    %v280 = vsel %vm240, 1, 0
    %v281 = vsel %vm241, 1, 0
    %v282 = vsel %vm242, 1, 0
    %v283 = vsel %vm243, 1, 0
    %v284 = vsel %vm244, 1, 0
    %v285 = vsel %vm245, 1, 0
    %v286 = vsel %vm246, 1, 0
    %v287 = vsel %vm247, 1, 0
    %v288 = vcvt.s32.f32 %v248
    %v289 = vcvt.s32.f32 %v249
    %v290 = vcvt.s32.f32 %v250
    %v291 = vcvt.s32.f32 %v251
    %v292 = vcvt.s32.f32 %v252
    %v293 = vcvt.s32.f32 %v253
    %v294 = vcvt.s32.f32 %v254
    %v295 = vcvt.s32.f32 %v255
    %v296 = vcvt.s32.f32 %v256
    %v297 = vcvt.s32.f32 %v257
    %v298 = vcvt.s32.f32 %v258
    %v299 = vcvt.s32.f32 %v259
    %v300 = vcvt.s32.f32 %v260
    %v301 = vcvt.s32.f32 %v261
    %v302 = vcvt.s32.f32 %v262
    %v303 = vcvt.s32.f32 %v263
    %v304 = vcvt.s32.f32 %v264
    %v305 = vcvt.s32.f32 %v265
    %v306 = vcvt.s32.f32 %v266
    %v307 = vcvt.s32.f32 %v267
    %v308 = vcvt.s32.f32 %v268
    %v309 = vcvt.s32.f32 %v269
    %v310 = vcvt.s32.f32 %v270
    %v311 = vcvt.s32.f32 %v271
    %v312 = vcvt.s32.f32 %v272
    %v313 = vcvt.s32.f32 %v273
    %v314 = vcvt.s32.f32 %v274
    %v315 = vcvt.s32.f32 %v275
    %v316 = vcvt.s32.f32 %v276
    %v317 = vcvt.s32.f32 %v277
    %v318 = vcvt.s32.f32 %v278
    %v319 = vcvt.s32.f32 %v279
    %v320 = vcvt.s32.f32 %v280
    %v321 = vcvt.s32.f32 %v281
    %v322 = vcvt.s32.f32 %v282
    %v323 = vcvt.s32.f32 %v283
    %v324 = vcvt.s32.f32 %v284
    %v325 = vcvt.s32.f32 %v285
    %v326 = vcvt.s32.f32 %v286
    %v327 = vcvt.s32.f32 %v287
    %v328 = vsub.s32 %v145, %v166
    %v329 = vsub.s32 %v145, %v167
    %v330 = vsub.s32 %v146, %v166
    %v331 = vsub.s32 %v146, %v167
    %v332 = vsub.s32 %v147, %v166
    %v333 = vsub.s32 %v147, %v167
    %v334 = vsub.s32 %v148, %v166
    %v335 = vsub.s32 %v148, %v167
    %v336 = vsub.s32 %v149, %v166
    %v337 = vsub.s32 %v149, %v167
    %v338 = vsub.s32 %v150, %v166
    %v339 = vsub.s32 %v150, %v167
    %v340 = vsub.s32 %v151, %v166
    %v341 = vsub.s32 %v151, %v167
    %v342 = vsub.s32 %v152, %v166
    %v343 = vsub.s32 %v152, %v167
    %v344 = vsub.s32 %v153, %v166
    %v345 = vsub.s32 %v153, %v167
    %v346 = vsub.s32 %v154, %v166
    %v347 = vsub.s32 %v154, %v167
    %v348 = vsub.s32 %v155, %v166
    %v349 = vsub.s32 %v155, %v167
    %v350 = vsub.s32 %v156, %v166
    %v351 = vsub.s32 %v156, %v167
    %v352 = vsub.s32 %v157, %v166
    %v353 = vsub.s32 %v157, %v167
    %v354 = vsub.s32 %v158, %v166
    %v355 = vsub.s32 %v158, %v167
    %v356 = vsub.s32 %v159, %v166
    %v357 = vsub.s32 %v159, %v167
    %v358 = vsub.s32 %v160, %v166
    %v359 = vsub.s32 %v160, %v167
    %v360 = vsub.s32 %v161, %v166
    %v361 = vsub.s32 %v161, %v167
    %v362 = vsub.s32 %v162, %v166
    %v363 = vsub.s32 %v162, %v167
    %v364 = vsub.s32 %v163, %v166
    %v365 = vsub.s32 %v163, %v167
    %v366 = vsub.s32 %v164, %v166
    %v367 = vsub.s32 %v164, %v167
    %vm368 = vcmp.eq.s32.totalorder %v328, 16
    %vm369 = vcmp.eq.s32.totalorder %v329, 16
    %vm370 = vcmp.eq.s32.totalorder %v330, 16
    %vm371 = vcmp.eq.s32.totalorder %v331, 16
    %vm372 = vcmp.eq.s32.totalorder %v332, 16
    %vm373 = vcmp.eq.s32.totalorder %v333, 16
    %vm374 = vcmp.eq.s32.totalorder %v334, 16
    %vm375 = vcmp.eq.s32.totalorder %v335, 16
    %vm376 = vcmp.eq.s32.totalorder %v336, 16
    %vm377 = vcmp.eq.s32.totalorder %v337, 16
    %vm378 = vcmp.eq.s32.totalorder %v338, 16
    %vm379 = vcmp.eq.s32.totalorder %v339, 16
    %vm380 = vcmp.eq.s32.totalorder %v340, 16
    %vm381 = vcmp.eq.s32.totalorder %v341, 16
    %vm382 = vcmp.eq.s32.totalorder %v342, 16
    %vm383 = vcmp.eq.s32.totalorder %v343, 16
    %vm384 = vcmp.eq.s32.totalorder %v344, 16
    %vm385 = vcmp.eq.s32.totalorder %v345, 16
    %vm386 = vcmp.eq.s32.totalorder %v346, 16
    %vm387 = vcmp.eq.s32.totalorder %v347, 16
    %vm388 = vcmp.eq.s32.totalorder %v348, 16
    %vm389 = vcmp.eq.s32.totalorder %v349, 16
    %vm390 = vcmp.eq.s32.totalorder %v350, 16
    %vm391 = vcmp.eq.s32.totalorder %v351, 16
    %vm392 = vcmp.eq.s32.totalorder %v352, 16
    %vm393 = vcmp.eq.s32.totalorder %v353, 16
    %vm394 = vcmp.eq.s32.totalorder %v354, 16
    %vm395 = vcmp.eq.s32.totalorder %v355, 16
    %vm396 = vcmp.eq.s32.totalorder %v356, 16
    %vm397 = vcmp.eq.s32.totalorder %v357, 16
    %vm398 = vcmp.eq.s32.totalorder %v358, 16
    %vm399 = vcmp.eq.s32.totalorder %v359, 16
    %vm400 = vcmp.eq.s32.totalorder %v360, 16
    %vm401 = vcmp.eq.s32.totalorder %v361, 16
    %vm402 = vcmp.eq.s32.totalorder %v362, 16
    %vm403 = vcmp.eq.s32.totalorder %v363, 16
    %vm404 = vcmp.eq.s32.totalorder %v364, 16
    %vm405 = vcmp.eq.s32.totalorder %v365, 16
    %vm406 = vcmp.eq.s32.totalorder %v366, 16
    %vm407 = vcmp.eq.s32.totalorder %v367, 16
    %v408 = vsel %vm368, 1, 0
    %v409 = vsel %vm369, 1, 0
    %v410 = vsel %vm370, 1, 0
    %v411 = vsel %vm371, 1, 0
    %v412 = vsel %vm372, 1, 0
    %v413 = vsel %vm373, 1, 0
    %v414 = vsel %vm374, 1, 0
    %v415 = vsel %vm375, 1, 0
    %v416 = vsel %vm376, 1, 0
    %v417 = vsel %vm377, 1, 0
    %v418 = vsel %vm378, 1, 0
    %v419 = vsel %vm379, 1, 0
    %v420 = vsel %vm380, 1, 0
    %v421 = vsel %vm381, 1, 0
    %v422 = vsel %vm382, 1, 0
    %v423 = vsel %vm383, 1, 0
    %v424 = vsel %vm384, 1, 0
    %v425 = vsel %vm385, 1, 0
    %v426 = vsel %vm386, 1, 0
    %v427 = vsel %vm387, 1, 0
    %v428 = vsel %vm388, 1, 0
    %v429 = vsel %vm389, 1, 0
    %v430 = vsel %vm390, 1, 0
    %v431 = vsel %vm391, 1, 0
    %v432 = vsel %vm392, 1, 0
    %v433 = vsel %vm393, 1, 0
    %v434 = vsel %vm394, 1, 0
    %v435 = vsel %vm395, 1, 0
    %v436 = vsel %vm396, 1, 0
    %v437 = vsel %vm397, 1, 0
    %v438 = vsel %vm398, 1, 0
    %v439 = vsel %vm399, 1, 0
    %v440 = vsel %vm400, 1, 0
    %v441 = vsel %vm401, 1, 0
    %v442 = vsel %vm402, 1, 0
    %v443 = vsel %vm403, 1, 0
    %v444 = vsel %vm404, 1, 0
    %v445 = vsel %vm405, 1, 0
    %v446 = vsel %vm406, 1, 0
    %v447 = vsel %vm407, 1, 0
    %v448 = vcvt.s32.f32 %v408
    %v449 = vcvt.s32.f32 %v409
    %v450 = vcvt.s32.f32 %v410
    %v451 = vcvt.s32.f32 %v411
    %v452 = vcvt.s32.f32 %v412
    %v453 = vcvt.s32.f32 %v413
    %v454 = vcvt.s32.f32 %v414
    %v455 = vcvt.s32.f32 %v415
    %v456 = vcvt.s32.f32 %v416
    %v457 = vcvt.s32.f32 %v417
    %v458 = vcvt.s32.f32 %v418
    %v459 = vcvt.s32.f32 %v419
    %v460 = vcvt.s32.f32 %v420
    %v461 = vcvt.s32.f32 %v421
    %v462 = vcvt.s32.f32 %v422
    %v463 = vcvt.s32.f32 %v423
    %v464 = vcvt.s32.f32 %v424
    %v465 = vcvt.s32.f32 %v425
    %v466 = vcvt.s32.f32 %v426
    %v467 = vcvt.s32.f32 %v427
    %v468 = vcvt.s32.f32 %v428
    %v469 = vcvt.s32.f32 %v429
    %v470 = vcvt.s32.f32 %v430
    %v471 = vcvt.s32.f32 %v431
    %v472 = vcvt.s32.f32 %v432
    %v473 = vcvt.s32.f32 %v433
    %v474 = vcvt.s32.f32 %v434
    %v475 = vcvt.s32.f32 %v435
    %v476 = vcvt.s32.f32 %v436
    %v477 = vcvt.s32.f32 %v437
    %v478 = vcvt.s32.f32 %v438
    %v479 = vcvt.s32.f32 %v439
    %v480 = vcvt.s32.f32 %v440
    %v481 = vcvt.s32.f32 %v441
    %v482 = vcvt.s32.f32 %v442
    %v483 = vcvt.s32.f32 %v443
    %v484 = vcvt.s32.f32 %v444
    %v485 = vcvt.s32.f32 %v445
    %v486 = vcvt.s32.f32 %v446
    %v487 = vcvt.s32.f32 %v447
    %v488 = vld [vmem:[%s3] sm:$0xff]
    %v489 = vld [vmem:[%s3 + $0x8] sm:$0xff]
    %v490 = vld [vmem:[%s3 + $0x10] sm:$0xff]
    %v491 = vld [vmem:[%s3 + $0x18] sm:$0xff]
    %vm492 = vcmask 261120
    %v494 = vsel %vm492, %v137, 0
    %v497 = vsel %vm492, %v139, 0
    %v500 = vsel %vm492, %v141, 0
    %v503 = vsel %vm492, %v143, 0
    %505 = vmatpush.msra.mxu0 %v318
    %506 = vmatpush.msra.mxu0 %v316
    %507 = vmatpush.msra.mxu0 %v314
    %508 = vmatpush.msra.mxu0 %v312
    %509 = vmatpush.msra.mxu0 %v310
    %510 = vmatpush.msra.mxu0 %v308
    %511 = vmatpush.msra.mxu0 %v306
    %512 = vmatpush.msra.mxu0 %v304
    %513 = vmatpush.msra.mxu0 %v302
    %514 = vmatpush.msra.mxu0 %v300
    %515 = vmatpush.msra.mxu0 %v298
    %516 = vmatpush.msra.mxu0 %v296
    %517 = vmatpush.msra.mxu0 %v294
    %518 = vmatpush.msra.mxu0 %v292
    %519 = vmatpush.msra.mxu0 %v290
    %520 = vmatpush.msra.mxu0 %v288
    %521 = vmatmul.f32.gmra.mxu0 %v136
    %v522 = vpop.f32.mrf.mxu0
    %v523 = vadd.f32 0.0, %v522
    %524 = vmatmul.f32.gmra.mxu0 %v138
    %v525 = vpop.f32.mrf.mxu0
    %v526 = vadd.f32 0.0, %v525
    %527 = vmatmul.f32.gmra.mxu0 %v140
    %v528 = vpop.f32.mrf.mxu0
    %v529 = vadd.f32 0.0, %v528
    %530 = vmatmul.f32.gmra.mxu0 %v142
    %v531 = vpop.f32.mrf.mxu0
    %v532 = vadd.f32 0.0, %v531
    %533 = vdwg.mxu0
    %534 = vmatpush.msra.mxu0 0.0
    %535 = vmatpush.msra.mxu0 0.0
    %536 = vmatpush.msra.mxu0 0.0
    %537 = vmatpush.msra.mxu0 0.0
    %538 = vmatpush.msra.mxu0 0.0
    %539 = vmatpush.msra.mxu0 0.0
    %540 = vmatpush.msra.mxu0 0.0
    %541 = vmatpush.msra.mxu0 0.0
    %542 = vmatpush.msra.mxu0 0.0
    %543 = vmatpush.msra.mxu0 0.0
    %544 = vmatpush.msra.mxu0 0.0
    %545 = vmatpush.msra.mxu0 0.0
    %546 = vmatpush.msra.mxu0 %v326
    %547 = vmatpush.msra.mxu0 %v324
    %548 = vmatpush.msra.mxu0 %v322
    %549 = vmatpush.msra.mxu0 %v320
    %550 = vmatmul.f32.gmra.mxu0 %v494
    %v551 = vpop.f32.mrf.mxu0
    %v552 = vadd.f32 %v523, %v551
    %553 = vmatmul.f32.gmra.mxu0 %v497
    %v554 = vpop.f32.mrf.mxu0
    %v555 = vadd.f32 %v526, %v554
    %556 = vmatmul.f32.gmra.mxu0 %v500
    %v557 = vpop.f32.mrf.mxu0
    %v558 = vadd.f32 %v529, %v557
    %559 = vmatmul.f32.gmra.mxu0 %v503
    %v560 = vpop.f32.mrf.mxu0
    %v561 = vadd.f32 %v532, %v560
    %562 = vdwg.mxu0
    %563 = vmatpush.msra.mxu0 %v319
    %564 = vmatpush.msra.mxu0 %v317
    %565 = vmatpush.msra.mxu0 %v315
    %566 = vmatpush.msra.mxu0 %v313
    %567 = vmatpush.msra.mxu0 %v311
    %568 = vmatpush.msra.mxu0 %v309
    %569 = vmatpush.msra.mxu0 %v307
    %570 = vmatpush.msra.mxu0 %v305
    %571 = vmatpush.msra.mxu0 %v303
    %572 = vmatpush.msra.mxu0 %v301
    %573 = vmatpush.msra.mxu0 %v299
    %574 = vmatpush.msra.mxu0 %v297
    %575 = vmatpush.msra.mxu0 %v295
    %576 = vmatpush.msra.mxu0 %v293
    %577 = vmatpush.msra.mxu0 %v291
    %578 = vmatpush.msra.mxu0 %v289
    %579 = vmatmul.f32.gmra.mxu0 %v136
    %v580 = vpop.f32.mrf.mxu0
    %v581 = vadd.f32 0.0, %v580
    %582 = vmatmul.f32.gmra.mxu0 %v138
    %v583 = vpop.f32.mrf.mxu0
    %v584 = vadd.f32 0.0, %v583
    %585 = vmatmul.f32.gmra.mxu0 %v140
    %v586 = vpop.f32.mrf.mxu0
    %v587 = vadd.f32 0.0, %v586
    %588 = vmatmul.f32.gmra.mxu0 %v142
    %v589 = vpop.f32.mrf.mxu0
    %v590 = vadd.f32 0.0, %v589
    %591 = vdwg.mxu0
    %592 = vmatpush.msra.mxu0 0.0
    %593 = vmatpush.msra.mxu0 0.0
    %594 = vmatpush.msra.mxu0 0.0
    %595 = vmatpush.msra.mxu0 0.0
    %596 = vmatpush.msra.mxu0 0.0
    %597 = vmatpush.msra.mxu0 0.0
    %598 = vmatpush.msra.mxu0 0.0
    %599 = vmatpush.msra.mxu0 0.0
    %600 = vmatpush.msra.mxu0 0.0
    %601 = vmatpush.msra.mxu0 0.0
    %602 = vmatpush.msra.mxu0 0.0
    %603 = vmatpush.msra.mxu0 0.0
    %604 = vmatpush.msra.mxu0 %v327
    %605 = vmatpush.msra.mxu0 %v325
    %606 = vmatpush.msra.mxu0 %v323
    %607 = vmatpush.msra.mxu0 %v321
    %608 = vmatmul.f32.gmra.mxu0 %v494
    %v609 = vpop.f32.mrf.mxu0
    %v610 = vadd.f32 %v581, %v609
    %611 = vmatmul.f32.gmra.mxu0 %v497
    %v612 = vpop.f32.mrf.mxu0
    %v613 = vadd.f32 %v584, %v612
    %614 = vmatmul.f32.gmra.mxu0 %v500
    %v615 = vpop.f32.mrf.mxu0
    %v616 = vadd.f32 %v587, %v615
    %617 = vmatmul.f32.gmra.mxu0 %v503
    %v618 = vpop.f32.mrf.mxu0
    %v619 = vadd.f32 %v590, %v618
    %620 = vdwg.mxu0
    %622 = vset.pattern.permute.xlu0 0
    %623 = vperm.xlu0 %622, %v488
    %v624 = vpop.permute.xlu0 %623
    %627 = vset.pattern.permute.xlu0 0
    %628 = vperm.xlu0 %627, %v489
    %v629 = vpop.permute.xlu0 %628
    %632 = vset.pattern.permute.xlu0 0
    %633 = vperm.xlu0 %632, %v490
    %v634 = vpop.permute.xlu0 %633
    %637 = vset.pattern.permute.xlu0 0
    %638 = vperm.xlu0 %637, %v491
    %v639 = vpop.permute.xlu0 %638
    %v641 = vmul.f32 %v624, %v552
    %v642 = vmul.f32 %v624, %v610
    %v643 = vmul.f32 %v629, %v555
    %v644 = vmul.f32 %v629, %v613
    %v645 = vmul.f32 %v634, %v558
    %v646 = vmul.f32 %v634, %v616
    %v647 = vmul.f32 %v639, %v561
    %v648 = vmul.f32 %v639, %v619
    %s649 = scalar_lea.vmem %s3, 32
    %v650 = vld [vmem:[%s649] sm:$0xff]
    %v651 = vld [vmem:[%s649 + $0x8] sm:$0xff]
    %v652 = vld [vmem:[%s649 + $0x10] sm:$0xff]
    %v653 = vld [vmem:[%s649 + $0x18] sm:$0xff]
    %655 = vset.pattern.permute.xlu0 0
    %656 = vperm.xlu0 %655, %v650
    %v657 = vpop.permute.xlu0 %656
    %660 = vset.pattern.permute.xlu0 0
    %661 = vperm.xlu0 %660, %v651
    %v662 = vpop.permute.xlu0 %661
    %665 = vset.pattern.permute.xlu0 0
    %666 = vperm.xlu0 %665, %v652
    %v667 = vpop.permute.xlu0 %666
    %670 = vset.pattern.permute.xlu0 0
    %671 = vperm.xlu0 %670, %v653
    %v672 = vpop.permute.xlu0 %671
    %v674 = vmul.f32 %v657, %v136
    %v675 = vmul.f32 %v657, %v137
    %v676 = vmul.f32 %v662, %v138
    %v677 = vmul.f32 %v662, %v139
    %v678 = vmul.f32 %v667, %v140
    %v679 = vmul.f32 %v667, %v141
    %v680 = vmul.f32 %v672, %v142
    %v681 = vmul.f32 %v672, %v143
    %v682 = vadd.f32 %v641, %v674
    %v683 = vadd.f32 %v642, %v675
    %v684 = vadd.f32 %v643, %v676
    %v685 = vadd.f32 %v644, %v677
    %v686 = vadd.f32 %v645, %v678
    %v687 = vadd.f32 %v646, %v679
    %v688 = vadd.f32 %v647, %v680
    %v689 = vadd.f32 %v648, %v681
    %s690 = scalar_lea.vmem %s3, 64
    %v691 = vld [vmem:[%s690] sm:$0xff]
    %v692 = vld [vmem:[%s690 + $0x8] sm:$0xff]
    %v693 = vld [vmem:[%s690 + $0x10] sm:$0xff]
    %v694 = vld [vmem:[%s690 + $0x18] sm:$0xff]
    %695 = vmatpush.msra.mxu0 %v478
    %696 = vmatpush.msra.mxu0 %v476
    %697 = vmatpush.msra.mxu0 %v474
    %698 = vmatpush.msra.mxu0 %v472
    %699 = vmatpush.msra.mxu0 %v470
    %700 = vmatpush.msra.mxu0 %v468
    %701 = vmatpush.msra.mxu0 %v466
    %702 = vmatpush.msra.mxu0 %v464
    %703 = vmatpush.msra.mxu0 %v462
    %704 = vmatpush.msra.mxu0 %v460
    %705 = vmatpush.msra.mxu0 %v458
    %706 = vmatpush.msra.mxu0 %v456
    %707 = vmatpush.msra.mxu0 %v454
    %708 = vmatpush.msra.mxu0 %v452
    %709 = vmatpush.msra.mxu0 %v450
    %710 = vmatpush.msra.mxu0 %v448
    %711 = vmatmul.f32.gmra.mxu0 %v136
    %v712 = vpop.f32.mrf.mxu0
    %v713 = vadd.f32 0.0, %v712
    %714 = vmatmul.f32.gmra.mxu0 %v138
    %v715 = vpop.f32.mrf.mxu0
    %v716 = vadd.f32 0.0, %v715
    %717 = vmatmul.f32.gmra.mxu0 %v140
    %v718 = vpop.f32.mrf.mxu0
    %v719 = vadd.f32 0.0, %v718
    %720 = vmatmul.f32.gmra.mxu0 %v142
    %v721 = vpop.f32.mrf.mxu0
    %v722 = vadd.f32 0.0, %v721
    %723 = vdwg.mxu0
    %724 = vmatpush.msra.mxu0 0.0
    %725 = vmatpush.msra.mxu0 0.0
    %726 = vmatpush.msra.mxu0 0.0
    %727 = vmatpush.msra.mxu0 0.0
    %728 = vmatpush.msra.mxu0 0.0
    %729 = vmatpush.msra.mxu0 0.0
    %730 = vmatpush.msra.mxu0 0.0
    %731 = vmatpush.msra.mxu0 0.0
    %732 = vmatpush.msra.mxu0 0.0
    %733 = vmatpush.msra.mxu0 0.0
    %734 = vmatpush.msra.mxu0 0.0
    %735 = vmatpush.msra.mxu0 0.0
    %736 = vmatpush.msra.mxu0 %v486
    %737 = vmatpush.msra.mxu0 %v484
    %738 = vmatpush.msra.mxu0 %v482
    %739 = vmatpush.msra.mxu0 %v480
    %740 = vmatmul.f32.gmra.mxu0 %v494
    %v741 = vpop.f32.mrf.mxu0
    %v742 = vadd.f32 %v713, %v741
    %743 = vmatmul.f32.gmra.mxu0 %v497
    %v744 = vpop.f32.mrf.mxu0
    %v745 = vadd.f32 %v716, %v744
    %746 = vmatmul.f32.gmra.mxu0 %v500
    %v747 = vpop.f32.mrf.mxu0
    %v748 = vadd.f32 %v719, %v747
    %749 = vmatmul.f32.gmra.mxu0 %v503
    %v750 = vpop.f32.mrf.mxu0
    %v751 = vadd.f32 %v722, %v750
    %752 = vdwg.mxu0
    %753 = vmatpush.msra.mxu0 %v479
    %754 = vmatpush.msra.mxu0 %v477
    %755 = vmatpush.msra.mxu0 %v475
    %756 = vmatpush.msra.mxu0 %v473
    %757 = vmatpush.msra.mxu0 %v471
    %758 = vmatpush.msra.mxu0 %v469
    %759 = vmatpush.msra.mxu0 %v467
    %760 = vmatpush.msra.mxu0 %v465
    %761 = vmatpush.msra.mxu0 %v463
    %762 = vmatpush.msra.mxu0 %v461
    %763 = vmatpush.msra.mxu0 %v459
    %764 = vmatpush.msra.mxu0 %v457
    %765 = vmatpush.msra.mxu0 %v455
    %766 = vmatpush.msra.mxu0 %v453
    %767 = vmatpush.msra.mxu0 %v451
    %768 = vmatpush.msra.mxu0 %v449
    %769 = vmatmul.f32.gmra.mxu0 %v136
    %v770 = vpop.f32.mrf.mxu0
    %v771 = vadd.f32 0.0, %v770
    %772 = vmatmul.f32.gmra.mxu0 %v138
    %v773 = vpop.f32.mrf.mxu0
    %v774 = vadd.f32 0.0, %v773
    %775 = vmatmul.f32.gmra.mxu0 %v140
    %v776 = vpop.f32.mrf.mxu0
    %v777 = vadd.f32 0.0, %v776
    %778 = vmatmul.f32.gmra.mxu0 %v142
    %v779 = vpop.f32.mrf.mxu0
    %v780 = vadd.f32 0.0, %v779
    %781 = vdwg.mxu0
    %782 = vmatpush.msra.mxu0 0.0
    %783 = vmatpush.msra.mxu0 0.0
    %784 = vmatpush.msra.mxu0 0.0
    %785 = vmatpush.msra.mxu0 0.0
    %786 = vmatpush.msra.mxu0 0.0
    %787 = vmatpush.msra.mxu0 0.0
    %788 = vmatpush.msra.mxu0 0.0
    %789 = vmatpush.msra.mxu0 0.0
    %790 = vmatpush.msra.mxu0 0.0
    %791 = vmatpush.msra.mxu0 0.0
    %792 = vmatpush.msra.mxu0 0.0
    %793 = vmatpush.msra.mxu0 0.0
    %794 = vmatpush.msra.mxu0 %v487
    %795 = vmatpush.msra.mxu0 %v485
    %796 = vmatpush.msra.mxu0 %v483
    %797 = vmatpush.msra.mxu0 %v481
    %798 = vmatmul.f32.gmra.mxu0 %v494
    %v799 = vpop.f32.mrf.mxu0
    %v800 = vadd.f32 %v771, %v799
    %801 = vmatmul.f32.gmra.mxu0 %v497
    %v802 = vpop.f32.mrf.mxu0
    %v803 = vadd.f32 %v774, %v802
    %804 = vmatmul.f32.gmra.mxu0 %v500
    %v805 = vpop.f32.mrf.mxu0
    %v806 = vadd.f32 %v777, %v805
    %807 = vmatmul.f32.gmra.mxu0 %v503
    %v808 = vpop.f32.mrf.mxu0
    %v809 = vadd.f32 %v780, %v808
    %810 = vdwg.mxu0
    %812 = vset.pattern.permute.xlu0 0
    %813 = vperm.xlu0 %812, %v691
    %v814 = vpop.permute.xlu0 %813
    %817 = vset.pattern.permute.xlu0 0
    %818 = vperm.xlu0 %817, %v692
    %v819 = vpop.permute.xlu0 %818
    %822 = vset.pattern.permute.xlu0 0
    %823 = vperm.xlu0 %822, %v693
    %v824 = vpop.permute.xlu0 %823
    %827 = vset.pattern.permute.xlu0 0
    %828 = vperm.xlu0 %827, %v694
    %v829 = vpop.permute.xlu0 %828
    %v831 = vmul.f32 %v814, %v742
    %v832 = vmul.f32 %v814, %v800
    %v833 = vmul.f32 %v819, %v745
    %v834 = vmul.f32 %v819, %v803
    %v835 = vmul.f32 %v824, %v748
    %v836 = vmul.f32 %v824, %v806
    %v837 = vmul.f32 %v829, %v751
    %v838 = vmul.f32 %v829, %v809
    %v839 = vadd.f32 %v682, %v831
    %v840 = vadd.f32 %v683, %v832
    %v841 = vadd.f32 %v684, %v833
    %v842 = vadd.f32 %v685, %v834
    %v843 = vadd.f32 %v686, %v835
    %v844 = vadd.f32 %v687, %v836
    %v845 = vadd.f32 %v688, %v837
    %v846 = vadd.f32 %v689, %v838
    %v847 = vld [vmem:[%s4] sm:$0xff]
    %v848 = vld [vmem:[%s4 + $0x8] sm:$0xff]
    %v849 = vld [vmem:[%s4 + $0x10] sm:$0xff]
    %v850 = vld [vmem:[%s4 + $0x18] sm:$0xff]
    %v851 = vld [vmem:[%s4 + $0x20] sm:$0xff]
    %v852 = vld [vmem:[%s4 + $0x28] sm:$0xff]
    %v853 = vld [vmem:[%s4 + $0x30] sm:$0xff]
    %v854 = vld [vmem:[%s4 + $0x38] sm:$0xff]
    %v855 = vmul.f32 %v839, %v847
    %v856 = vmul.f32 %v840, %v848
    %v857 = vmul.f32 %v841, %v849
    %v858 = vmul.f32 %v842, %v850
    %v859 = vmul.f32 %v843, %v851
    %v860 = vmul.f32 %v844, %v852
    %v861 = vmul.f32 %v845, %v853
    %v862 = vmul.f32 %v846, %v854
    %v863 = vld [vmem:[%s5] sm:$0xff]
    %v864 = vld [vmem:[%s5 + $0x8] sm:$0xff]
    %v865 = vld [vmem:[%s5 + $0x10] sm:$0xff]
    %v866 = vld [vmem:[%s5 + $0x18] sm:$0xff]
    %v867 = vld [vmem:[%s5 + $0x20] sm:$0xff]
    %v868 = vld [vmem:[%s5 + $0x28] sm:$0xff]
    %v869 = vld [vmem:[%s5 + $0x30] sm:$0xff]
    %v870 = vld [vmem:[%s5 + $0x38] sm:$0xff]
    %v871 = vadd.f32 %v855, %v863
    %v872 = vadd.f32 %v856, %v864
    %v873 = vadd.f32 %v857, %v865
    %v874 = vadd.f32 %v858, %v866
    %v875 = vadd.f32 %v859, %v867
    %v876 = vadd.f32 %v860, %v868
    %v877 = vadd.f32 %v861, %v869
    %v878 = vadd.f32 %v862, %v870
    %vm879 = vcmp.eq.s32.totalorder %v328, 0
    %vm880 = vcmp.eq.s32.totalorder %v330, 0
    %vm881 = vcmp.eq.s32.totalorder %v332, 0
    %vm882 = vcmp.eq.s32.totalorder %v334, 0
    %vm883 = vcmp.eq.s32.totalorder %v336, 0
    %vm884 = vcmp.eq.s32.totalorder %v338, 0
    %vm885 = vcmp.eq.s32.totalorder %v340, 0
    %vm886 = vcmp.eq.s32.totalorder %v342, 0
    %vm887 = vcmp.eq.s32.totalorder %v344, 0
    %vm888 = vcmp.eq.s32.totalorder %v346, 0
    %vm889 = vcmp.eq.s32.totalorder %v348, 0
    %vm890 = vcmp.eq.s32.totalorder %v350, 0
    %vm891 = vcmp.eq.s32.totalorder %v352, 0
    %vm892 = vcmp.eq.s32.totalorder %v354, 0
    %vm893 = vcmp.eq.s32.totalorder %v356, 0
    %vm894 = vcmp.eq.s32.totalorder %v358, 0
    %vm895 = vcmp.eq.s32.totalorder %v360, 0
    %vm896 = vcmp.eq.s32.totalorder %v362, 0
    %vm897 = vcmp.eq.s32.totalorder %v364, 0
    %vm898 = vcmp.eq.s32.totalorder %v366, 0
    %vm899 = vmor %vm879, %vm368
    %vm900 = vmor %vm880, %vm370
    %vm901 = vmor %vm881, %vm372
    %vm902 = vmor %vm882, %vm374
    %vm903 = vmor %vm883, %vm376
    %vm904 = vmor %vm884, %vm378
    %vm905 = vmor %vm885, %vm380
    %vm906 = vmor %vm886, %vm382
    %vm907 = vmor %vm887, %vm384
    %vm908 = vmor %vm888, %vm386
    %vm909 = vmor %vm889, %vm388
    %vm910 = vmor %vm890, %vm390
    %vm911 = vmor %vm891, %vm392
    %vm912 = vmor %vm892, %vm394
    %vm913 = vmor %vm893, %vm396
    %vm914 = vmor %vm894, %vm398
    %vm915 = vmor %vm895, %vm400
    %vm916 = vmor %vm896, %vm402
    %vm917 = vmor %vm897, %vm404
    %vm918 = vmor %vm898, %vm406
    %vm919 = vcmp.eq.s32.totalorder %v328, 32
    %vm920 = vcmp.eq.s32.totalorder %v330, 32
    %vm921 = vcmp.eq.s32.totalorder %v332, 32
    %vm922 = vcmp.eq.s32.totalorder %v334, 32
    %vm923 = vcmp.eq.s32.totalorder %v336, 32
    %vm924 = vcmp.eq.s32.totalorder %v338, 32
    %vm925 = vcmp.eq.s32.totalorder %v340, 32
    %vm926 = vcmp.eq.s32.totalorder %v342, 32
    %vm927 = vcmp.eq.s32.totalorder %v344, 32
    %vm928 = vcmp.eq.s32.totalorder %v346, 32
    %vm929 = vcmp.eq.s32.totalorder %v348, 32
    %vm930 = vcmp.eq.s32.totalorder %v350, 32
    %vm931 = vcmp.eq.s32.totalorder %v352, 32
    %vm932 = vcmp.eq.s32.totalorder %v354, 32
    %vm933 = vcmp.eq.s32.totalorder %v356, 32
    %vm934 = vcmp.eq.s32.totalorder %v358, 32
    %vm935 = vcmp.eq.s32.totalorder %v360, 32
    %vm936 = vcmp.eq.s32.totalorder %v362, 32
    %vm937 = vcmp.eq.s32.totalorder %v364, 32
    %vm938 = vcmp.eq.s32.totalorder %v366, 32
    %vm939 = vmor %vm899, %vm919
    %vm940 = vmor %vm900, %vm920
    %vm941 = vmor %vm901, %vm921
    %vm942 = vmor %vm902, %vm922
    %vm943 = vmor %vm903, %vm923
    %vm944 = vmor %vm904, %vm924
    %vm945 = vmor %vm905, %vm925
    %vm946 = vmor %vm906, %vm926
    %vm947 = vmor %vm907, %vm927
    %vm948 = vmor %vm908, %vm928
    %vm949 = vmor %vm909, %vm929
    %vm950 = vmor %vm910, %vm930
    %vm951 = vmor %vm911, %vm931
    %vm952 = vmor %vm912, %vm932
    %vm953 = vmor %vm913, %vm933
    %vm954 = vmor %vm914, %vm934
    %vm955 = vmor %vm915, %vm935
    %vm956 = vmor %vm916, %vm936
    %vm957 = vmor %vm917, %vm937
    %vm958 = vmor %vm918, %vm938
    %vm959 = vcmp.eq.s32.totalorder %v328, 48
    %vm960 = vcmp.eq.s32.totalorder %v330, 48
    %vm961 = vcmp.eq.s32.totalorder %v332, 48
    %vm962 = vcmp.eq.s32.totalorder %v334, 48
    %vm963 = vcmp.eq.s32.totalorder %v336, 48
    %vm964 = vcmp.eq.s32.totalorder %v338, 48
    %vm965 = vcmp.eq.s32.totalorder %v340, 48
    %vm966 = vcmp.eq.s32.totalorder %v342, 48
    %vm967 = vcmp.eq.s32.totalorder %v344, 48
    %vm968 = vcmp.eq.s32.totalorder %v346, 48
    %vm969 = vcmp.eq.s32.totalorder %v348, 48
    %vm970 = vcmp.eq.s32.totalorder %v350, 48
    %vm971 = vcmp.eq.s32.totalorder %v352, 48
    %vm972 = vcmp.eq.s32.totalorder %v354, 48
    %vm973 = vcmp.eq.s32.totalorder %v356, 48
    %vm974 = vcmp.eq.s32.totalorder %v358, 48
    %vm975 = vcmp.eq.s32.totalorder %v360, 48
    %vm976 = vcmp.eq.s32.totalorder %v362, 48
    %vm977 = vcmp.eq.s32.totalorder %v364, 48
    %vm978 = vcmp.eq.s32.totalorder %v366, 48
    %vm979 = vmor %vm939, %vm959
    %vm980 = vmor %vm940, %vm960
    %vm981 = vmor %vm941, %vm961
    %vm982 = vmor %vm942, %vm962
    %vm983 = vmor %vm943, %vm963
    %vm984 = vmor %vm944, %vm964
    %vm985 = vmor %vm945, %vm965
    %vm986 = vmor %vm946, %vm966
    %vm987 = vmor %vm947, %vm967
    %vm988 = vmor %vm948, %vm968
    %vm989 = vmor %vm949, %vm969
    %vm990 = vmor %vm950, %vm970
    %vm991 = vmor %vm951, %vm971
    %vm992 = vmor %vm952, %vm972
    %vm993 = vmor %vm953, %vm973
    %vm994 = vmor %vm954, %vm974
    %vm995 = vmor %vm955, %vm975
    %vm996 = vmor %vm956, %vm976
    %vm997 = vmor %vm957, %vm977
    %vm998 = vmor %vm958, %vm978
    %vm999 = vcmp.eq.s32.totalorder %v328, 64
    %vm1000 = vcmp.eq.s32.totalorder %v330, 64
    %vm1001 = vcmp.eq.s32.totalorder %v332, 64
    %vm1002 = vcmp.eq.s32.totalorder %v334, 64
    %vm1003 = vcmp.eq.s32.totalorder %v336, 64
    %vm1004 = vcmp.eq.s32.totalorder %v338, 64
    %vm1005 = vcmp.eq.s32.totalorder %v340, 64
    %vm1006 = vcmp.eq.s32.totalorder %v342, 64
    %vm1007 = vcmp.eq.s32.totalorder %v344, 64
    %vm1008 = vcmp.eq.s32.totalorder %v346, 64
    %vm1009 = vcmp.eq.s32.totalorder %v348, 64
    %vm1010 = vcmp.eq.s32.totalorder %v350, 64
    %vm1011 = vcmp.eq.s32.totalorder %v352, 64
    %vm1012 = vcmp.eq.s32.totalorder %v354, 64
    %vm1013 = vcmp.eq.s32.totalorder %v356, 64
    %vm1014 = vcmp.eq.s32.totalorder %v358, 64
    %vm1015 = vcmp.eq.s32.totalorder %v360, 64
    %vm1016 = vcmp.eq.s32.totalorder %v362, 64
    %vm1017 = vcmp.eq.s32.totalorder %v364, 64
    %vm1018 = vcmp.eq.s32.totalorder %v366, 64
    %vm1019 = vmor %vm979, %vm999
    %vm1020 = vmor %vm980, %vm1000
    %vm1021 = vmor %vm981, %vm1001
    %vm1022 = vmor %vm982, %vm1002
    %vm1023 = vmor %vm983, %vm1003
    %vm1024 = vmor %vm984, %vm1004
    %vm1025 = vmor %vm985, %vm1005
    %vm1026 = vmor %vm986, %vm1006
    %vm1027 = vmor %vm987, %vm1007
    %vm1028 = vmor %vm988, %vm1008
    %vm1029 = vmor %vm989, %vm1009
    %vm1030 = vmor %vm990, %vm1010
    %vm1031 = vmor %vm991, %vm1011
    %vm1032 = vmor %vm992, %vm1012
    %vm1033 = vmor %vm993, %vm1013
    %vm1034 = vmor %vm994, %vm1014
    %vm1035 = vmor %vm995, %vm1015
    %vm1036 = vmor %vm996, %vm1016
    %vm1037 = vmor %vm997, %vm1017
    %vm1038 = vmor %vm998, %vm1018
    %vm1039 = vcmp.eq.s32.totalorder %v328, 80
    %vm1040 = vcmp.eq.s32.totalorder %v330, 80
    %vm1041 = vcmp.eq.s32.totalorder %v332, 80
    %vm1042 = vcmp.eq.s32.totalorder %v334, 80
    %vm1043 = vcmp.eq.s32.totalorder %v336, 80
    %vm1044 = vcmp.eq.s32.totalorder %v338, 80
    %vm1045 = vcmp.eq.s32.totalorder %v340, 80
    %vm1046 = vcmp.eq.s32.totalorder %v342, 80
    %vm1047 = vcmp.eq.s32.totalorder %v344, 80
    %vm1048 = vcmp.eq.s32.totalorder %v346, 80
    %vm1049 = vcmp.eq.s32.totalorder %v348, 80
    %vm1050 = vcmp.eq.s32.totalorder %v350, 80
    %vm1051 = vcmp.eq.s32.totalorder %v352, 80
    %vm1052 = vcmp.eq.s32.totalorder %v354, 80
    %vm1053 = vcmp.eq.s32.totalorder %v356, 80
    %vm1054 = vcmp.eq.s32.totalorder %v358, 80
    %vm1055 = vcmp.eq.s32.totalorder %v360, 80
    %vm1056 = vcmp.eq.s32.totalorder %v362, 80
    %vm1057 = vcmp.eq.s32.totalorder %v364, 80
    %vm1058 = vcmp.eq.s32.totalorder %v366, 80
    %vm1059 = vmor %vm1019, %vm1039
    %vm1060 = vmor %vm1020, %vm1040
    %vm1061 = vmor %vm1021, %vm1041
    %vm1062 = vmor %vm1022, %vm1042
    %vm1063 = vmor %vm1023, %vm1043
    %vm1064 = vmor %vm1024, %vm1044
    %vm1065 = vmor %vm1025, %vm1045
    %vm1066 = vmor %vm1026, %vm1046
    %vm1067 = vmor %vm1027, %vm1047
    %vm1068 = vmor %vm1028, %vm1048
    %vm1069 = vmor %vm1029, %vm1049
    %vm1070 = vmor %vm1030, %vm1050
    %vm1071 = vmor %vm1031, %vm1051
    %vm1072 = vmor %vm1032, %vm1052
    %vm1073 = vmor %vm1033, %vm1053
    %vm1074 = vmor %vm1034, %vm1054
    %vm1075 = vmor %vm1035, %vm1055
    %vm1076 = vmor %vm1036, %vm1056
    %vm1077 = vmor %vm1037, %vm1057
    %vm1078 = vmor %vm1038, %vm1058
    %vm1079 = vcmp.eq.s32.totalorder %v328, 96
    %vm1080 = vcmp.eq.s32.totalorder %v330, 96
    %vm1081 = vcmp.eq.s32.totalorder %v332, 96
    %vm1082 = vcmp.eq.s32.totalorder %v334, 96
    %vm1083 = vcmp.eq.s32.totalorder %v336, 96
    %vm1084 = vcmp.eq.s32.totalorder %v338, 96
    %vm1085 = vcmp.eq.s32.totalorder %v340, 96
    %vm1086 = vcmp.eq.s32.totalorder %v342, 96
    %vm1087 = vcmp.eq.s32.totalorder %v344, 96
    %vm1088 = vcmp.eq.s32.totalorder %v346, 96
    %vm1089 = vcmp.eq.s32.totalorder %v348, 96
    %vm1090 = vcmp.eq.s32.totalorder %v350, 96
    %vm1091 = vcmp.eq.s32.totalorder %v352, 96
    %vm1092 = vcmp.eq.s32.totalorder %v354, 96
    %vm1093 = vcmp.eq.s32.totalorder %v356, 96
    %vm1094 = vcmp.eq.s32.totalorder %v358, 96
    %vm1095 = vcmp.eq.s32.totalorder %v360, 96
    %vm1096 = vcmp.eq.s32.totalorder %v362, 96
    %vm1097 = vcmp.eq.s32.totalorder %v364, 96
    %vm1098 = vcmp.eq.s32.totalorder %v366, 96
    %vm1099 = vmor %vm1059, %vm1079
    %vm1100 = vmor %vm1060, %vm1080
    %vm1101 = vmor %vm1061, %vm1081
    %vm1102 = vmor %vm1062, %vm1082
    %vm1103 = vmor %vm1063, %vm1083
    %vm1104 = vmor %vm1064, %vm1084
    %vm1105 = vmor %vm1065, %vm1085
    %vm1106 = vmor %vm1066, %vm1086
    %vm1107 = vmor %vm1067, %vm1087
    %vm1108 = vmor %vm1068, %vm1088
    %vm1109 = vmor %vm1069, %vm1089
    %vm1110 = vmor %vm1070, %vm1090
    %vm1111 = vmor %vm1071, %vm1091
    %vm1112 = vmor %vm1072, %vm1092
    %vm1113 = vmor %vm1073, %vm1093
    %vm1114 = vmor %vm1074, %vm1094
    %vm1115 = vmor %vm1075, %vm1095
    %vm1116 = vmor %vm1076, %vm1096
    %vm1117 = vmor %vm1077, %vm1097
    %vm1118 = vmor %vm1078, %vm1098
    %vm1119 = vcmp.eq.s32.totalorder %v328, 112
    %vm1120 = vcmp.eq.s32.totalorder %v330, 112
    %vm1121 = vcmp.eq.s32.totalorder %v332, 112
    %vm1122 = vcmp.eq.s32.totalorder %v334, 112
    %vm1123 = vcmp.eq.s32.totalorder %v336, 112
    %vm1124 = vcmp.eq.s32.totalorder %v338, 112
    %vm1125 = vcmp.eq.s32.totalorder %v340, 112
    %vm1126 = vcmp.eq.s32.totalorder %v342, 112
    %vm1127 = vcmp.eq.s32.totalorder %v344, 112
    %vm1128 = vcmp.eq.s32.totalorder %v346, 112
    %vm1129 = vcmp.eq.s32.totalorder %v348, 112
    %vm1130 = vcmp.eq.s32.totalorder %v350, 112
    %vm1131 = vcmp.eq.s32.totalorder %v352, 112
    %vm1132 = vcmp.eq.s32.totalorder %v354, 112
    %vm1133 = vcmp.eq.s32.totalorder %v356, 112
    %vm1134 = vcmp.eq.s32.totalorder %v358, 112
    %vm1135 = vcmp.eq.s32.totalorder %v360, 112
    %vm1136 = vcmp.eq.s32.totalorder %v362, 112
    %vm1137 = vcmp.eq.s32.totalorder %v364, 112
    %vm1138 = vcmp.eq.s32.totalorder %v366, 112
    %vm1139 = vmor %vm1099, %vm1119
    %vm1140 = vmor %vm1100, %vm1120
    %vm1141 = vmor %vm1101, %vm1121
    %vm1142 = vmor %vm1102, %vm1122
    %vm1143 = vmor %vm1103, %vm1123
    %vm1144 = vmor %vm1104, %vm1124
    %vm1145 = vmor %vm1105, %vm1125
    %vm1146 = vmor %vm1106, %vm1126
    %vm1147 = vmor %vm1107, %vm1127
    %vm1148 = vmor %vm1108, %vm1128
    %vm1149 = vmor %vm1109, %vm1129
    %vm1150 = vmor %vm1110, %vm1130
    %vm1151 = vmor %vm1111, %vm1131
    %vm1152 = vmor %vm1112, %vm1132
    %vm1153 = vmor %vm1113, %vm1133
    %vm1154 = vmor %vm1114, %vm1134
    %vm1155 = vmor %vm1115, %vm1135
    %vm1156 = vmor %vm1116, %vm1136
    %vm1157 = vmor %vm1117, %vm1137
    %vm1158 = vmor %vm1118, %vm1138
    %vm1159 = vcmp.eq.s32.totalorder %v328, 128
    %vm1160 = vcmp.eq.s32.totalorder %v330, 128
    %vm1161 = vcmp.eq.s32.totalorder %v332, 128
    %vm1162 = vcmp.eq.s32.totalorder %v334, 128
    %vm1163 = vcmp.eq.s32.totalorder %v336, 128
    %vm1164 = vcmp.eq.s32.totalorder %v338, 128
    %vm1165 = vcmp.eq.s32.totalorder %v340, 128
    %vm1166 = vcmp.eq.s32.totalorder %v342, 128
    %vm1167 = vcmp.eq.s32.totalorder %v344, 128
    %vm1168 = vcmp.eq.s32.totalorder %v346, 128
    %vm1169 = vcmp.eq.s32.totalorder %v348, 128
    %vm1170 = vcmp.eq.s32.totalorder %v350, 128
    %vm1171 = vcmp.eq.s32.totalorder %v352, 128
    %vm1172 = vcmp.eq.s32.totalorder %v354, 128
    %vm1173 = vcmp.eq.s32.totalorder %v356, 128
    %vm1174 = vcmp.eq.s32.totalorder %v358, 128
    %vm1175 = vcmp.eq.s32.totalorder %v360, 128
    %vm1176 = vcmp.eq.s32.totalorder %v362, 128
    %vm1177 = vcmp.eq.s32.totalorder %v364, 128
    %vm1178 = vcmp.eq.s32.totalorder %v366, 128
    %vm1179 = vmor %vm1139, %vm1159
    %vm1180 = vmor %vm1140, %vm1160
    %vm1181 = vmor %vm1141, %vm1161
    %vm1182 = vmor %vm1142, %vm1162
    %vm1183 = vmor %vm1143, %vm1163
    %vm1184 = vmor %vm1144, %vm1164
    %vm1185 = vmor %vm1145, %vm1165
    %vm1186 = vmor %vm1146, %vm1166
    %vm1187 = vmor %vm1147, %vm1167
    %vm1188 = vmor %vm1148, %vm1168
    %vm1189 = vmor %vm1149, %vm1169
    %vm1190 = vmor %vm1150, %vm1170
    %vm1191 = vmor %vm1151, %vm1171
    %vm1192 = vmor %vm1152, %vm1172
    %vm1193 = vmor %vm1153, %vm1173
    %vm1194 = vmor %vm1154, %vm1174
    %vm1195 = vmor %vm1155, %vm1175
    %vm1196 = vmor %vm1156, %vm1176
    %vm1197 = vmor %vm1157, %vm1177
    %vm1198 = vmor %vm1158, %vm1178
    %vm1199 = vcmp.eq.s32.totalorder %v328, 144
    %vm1200 = vcmp.eq.s32.totalorder %v330, 144
    %vm1201 = vcmp.eq.s32.totalorder %v332, 144
    %vm1202 = vcmp.eq.s32.totalorder %v334, 144
    %vm1203 = vcmp.eq.s32.totalorder %v336, 144
    %vm1204 = vcmp.eq.s32.totalorder %v338, 144
    %vm1205 = vcmp.eq.s32.totalorder %v340, 144
    %vm1206 = vcmp.eq.s32.totalorder %v342, 144
    %vm1207 = vcmp.eq.s32.totalorder %v344, 144
    %vm1208 = vcmp.eq.s32.totalorder %v346, 144
    %vm1209 = vcmp.eq.s32.totalorder %v348, 144
    %vm1210 = vcmp.eq.s32.totalorder %v350, 144
    %vm1211 = vcmp.eq.s32.totalorder %v352, 144
    %vm1212 = vcmp.eq.s32.totalorder %v354, 144
    %vm1213 = vcmp.eq.s32.totalorder %v356, 144
    %vm1214 = vcmp.eq.s32.totalorder %v358, 144
    %vm1215 = vcmp.eq.s32.totalorder %v360, 144
    %vm1216 = vcmp.eq.s32.totalorder %v362, 144
    %vm1217 = vcmp.eq.s32.totalorder %v364, 144
    %vm1218 = vcmp.eq.s32.totalorder %v366, 144
    %vm1219 = vmor %vm1179, %vm1199
    %vm1220 = vmor %vm1180, %vm1200
    %vm1221 = vmor %vm1181, %vm1201
    %vm1222 = vmor %vm1182, %vm1202
    %vm1223 = vmor %vm1183, %vm1203
    %vm1224 = vmor %vm1184, %vm1204
    %vm1225 = vmor %vm1185, %vm1205
    %vm1226 = vmor %vm1186, %vm1206
    %vm1227 = vmor %vm1187, %vm1207
    %vm1228 = vmor %vm1188, %vm1208
    %vm1229 = vmor %vm1189, %vm1209
    %vm1230 = vmor %vm1190, %vm1210
    %vm1231 = vmor %vm1191, %vm1211
    %vm1232 = vmor %vm1192, %vm1212
    %vm1233 = vmor %vm1193, %vm1213
    %vm1234 = vmor %vm1194, %vm1214
    %vm1235 = vmor %vm1195, %vm1215
    %vm1236 = vmor %vm1196, %vm1216
    %vm1237 = vmor %vm1197, %vm1217
    %vm1238 = vmor %vm1198, %vm1218
    %v1239 = vsel %vm1219, 1, 0
    %v1240 = vsel %vm1220, 1, 0
    %v1241 = vsel %vm1221, 1, 0
    %v1242 = vsel %vm1222, 1, 0
    %v1243 = vsel %vm1223, 1, 0
    %v1244 = vsel %vm1224, 1, 0
    %v1245 = vsel %vm1225, 1, 0
    %v1246 = vsel %vm1226, 1, 0
    %v1247 = vsel %vm1227, 1, 0
    %v1248 = vsel %vm1228, 1, 0
    %v1249 = vsel %vm1229, 1, 0
    %v1250 = vsel %vm1230, 1, 0
    %v1251 = vsel %vm1231, 1, 0
    %v1252 = vsel %vm1232, 1, 0
    %v1253 = vsel %vm1233, 1, 0
    %v1254 = vsel %vm1234, 1, 0
    %v1255 = vsel %vm1235, 1, 0
    %v1256 = vsel %vm1236, 1, 0
    %v1257 = vsel %vm1237, 1, 0
    %v1258 = vsel %vm1238, 1, 0
    %v1259 = vcvt.s32.f32 %v1239
    %v1260 = vcvt.s32.f32 %v1240
    %v1261 = vcvt.s32.f32 %v1241
    %v1262 = vcvt.s32.f32 %v1242
    %v1263 = vcvt.s32.f32 %v1243
    %v1264 = vcvt.s32.f32 %v1244
    %v1265 = vcvt.s32.f32 %v1245
    %v1266 = vcvt.s32.f32 %v1246
    %v1267 = vcvt.s32.f32 %v1247
    %v1268 = vcvt.s32.f32 %v1248
    %v1269 = vcvt.s32.f32 %v1249
    %v1270 = vcvt.s32.f32 %v1250
    %v1271 = vcvt.s32.f32 %v1251
    %v1272 = vcvt.s32.f32 %v1252
    %v1273 = vcvt.s32.f32 %v1253
    %v1274 = vcvt.s32.f32 %v1254
    %v1275 = vcvt.s32.f32 %v1255
    %v1276 = vcvt.s32.f32 %v1256
    %v1277 = vcvt.s32.f32 %v1257
    %v1278 = vcvt.s32.f32 %v1258
    %v1280 = vsel %vm492, %v872, 0
    %v1283 = vsel %vm492, %v874, 0
    %v1286 = vsel %vm492, %v876, 0
    %v1289 = vsel %vm492, %v878, 0
    %1291 = vmatpush.msra.mxu0 %v1274
    %1292 = vmatpush.msra.mxu0 %v1273
    %1293 = vmatpush.msra.mxu0 %v1272
    %1294 = vmatpush.msra.mxu0 %v1271
    %1295 = vmatpush.msra.mxu0 %v1270
    %1296 = vmatpush.msra.mxu0 %v1269
    %1297 = vmatpush.msra.mxu0 %v1268
    %1298 = vmatpush.msra.mxu0 %v1267
    %1299 = vmatpush.msra.mxu0 %v1266
    %1300 = vmatpush.msra.mxu0 %v1265
    %1301 = vmatpush.msra.mxu0 %v1264
    %1302 = vmatpush.msra.mxu0 %v1263
    %1303 = vmatpush.msra.mxu0 %v1262
    %1304 = vmatpush.msra.mxu0 %v1261
    %1305 = vmatpush.msra.mxu0 %v1260
    %1306 = vmatpush.msra.mxu0 %v1259
    %1307 = vmatmul.f32.gmra.mxu0 %v871
    %v1308 = vpop.f32.mrf.mxu0
    %v1309 = vadd.f32 0.0, %v1308
    %1310 = vmatmul.f32.gmra.mxu0 %v873
    %v1311 = vpop.f32.mrf.mxu0
    %v1312 = vadd.f32 0.0, %v1311
    %1313 = vmatmul.f32.gmra.mxu0 %v875
    %v1314 = vpop.f32.mrf.mxu0
    %v1315 = vadd.f32 0.0, %v1314
    %1316 = vmatmul.f32.gmra.mxu0 %v877
    %v1317 = vpop.f32.mrf.mxu0
    %v1318 = vadd.f32 0.0, %v1317
    %1319 = vdwg.mxu0
    %1320 = vmatpush.msra.mxu0 0.0
    %1321 = vmatpush.msra.mxu0 0.0
    %1322 = vmatpush.msra.mxu0 0.0
    %1323 = vmatpush.msra.mxu0 0.0
    %1324 = vmatpush.msra.mxu0 0.0
    %1325 = vmatpush.msra.mxu0 0.0
    %1326 = vmatpush.msra.mxu0 0.0
    %1327 = vmatpush.msra.mxu0 0.0
    %1328 = vmatpush.msra.mxu0 0.0
    %1329 = vmatpush.msra.mxu0 0.0
    %1330 = vmatpush.msra.mxu0 0.0
    %1331 = vmatpush.msra.mxu0 0.0
    %1332 = vmatpush.msra.mxu0 %v1278
    %1333 = vmatpush.msra.mxu0 %v1277
    %1334 = vmatpush.msra.mxu0 %v1276
    %1335 = vmatpush.msra.mxu0 %v1275
    %1336 = vmatmul.f32.gmra.mxu0 %v1280
    %v1337 = vpop.f32.mrf.mxu0
    %v1338 = vadd.f32 %v1309, %v1337
    %1339 = vmatmul.f32.gmra.mxu0 %v1283
    %v1340 = vpop.f32.mrf.mxu0
    %v1341 = vadd.f32 %v1312, %v1340
    %1342 = vmatmul.f32.gmra.mxu0 %v1286
    %v1343 = vpop.f32.mrf.mxu0
    %v1344 = vadd.f32 %v1315, %v1343
    %1345 = vmatmul.f32.gmra.mxu0 %v1289
    %v1346 = vpop.f32.mrf.mxu0
    %v1347 = vadd.f32 %v1318, %v1346
    %1348 = vdwg.mxu0
    %vm1349 = vcmp.eq.s32.totalorder %v168, 1
    %vm1350 = vcmp.eq.s32.totalorder %v170, 1
    %v1351 = vsel %vm1349, 1, 0
    %v1352 = vsel %vm1350, 1, 0
    %v1353 = vcvt.s32.f32 %v1351
    %v1354 = vcvt.s32.f32 %v1352
    %vm1355 = vcmp.eq.s32.totalorder %v328, 1
    %vm1356 = vcmp.eq.s32.totalorder %v330, 1
    %v1357 = vsel %vm1355, 1, 0
    %v1358 = vsel %vm1356, 1, 0
    %v1359 = vcvt.s32.f32 %v1357
    %v1360 = vcvt.s32.f32 %v1358
    %v1361 = vld [vmem:[%s6] sm:$0xff]
    %v1362 = vld [vmem:[%s6 + $0x8] sm:$0xff]
    %v1363 = vld [vmem:[%s6 + $0x10] sm:$0xff]
    %v1364 = vld [vmem:[%s6 + $0x18] sm:$0xff]
    %v1366 = vsel %vm65, %v1338, 0
    %v1369 = vsel %vm65, %v1341, 0
    %v1372 = vsel %vm65, %v1344, 0
    %v1375 = vsel %vm65, %v1347, 0
    %1377 = vmatpush.msra.mxu0 0.0
    %1378 = vmatpush.msra.mxu0 0.0
    %1379 = vmatpush.msra.mxu0 0.0
    %1380 = vmatpush.msra.mxu0 0.0
    %1381 = vmatpush.msra.mxu0 0.0
    %1382 = vmatpush.msra.mxu0 0.0
    %1383 = vmatpush.msra.mxu0 0.0
    %1384 = vmatpush.msra.mxu0 0.0
    %1385 = vmatpush.msra.mxu0 0.0
    %1386 = vmatpush.msra.mxu0 0.0
    %1387 = vmatpush.msra.mxu0 0.0
    %1388 = vmatpush.msra.mxu0 0.0
    %1389 = vmatpush.msra.mxu0 0.0
    %1390 = vmatpush.msra.mxu0 0.0
    %1391 = vmatpush.msra.mxu0 %v1354
    %1392 = vmatpush.msra.mxu0 %v1353
    %1393 = vmatmul.f32.gmra.mxu0 %v1366
    %v1394 = vpop.f32.mrf.mxu0
    %v1395 = vadd.f32 0.0, %v1394
    %1396 = vmatmul.f32.gmra.mxu0 %v1369
    %v1397 = vpop.f32.mrf.mxu0
    %v1398 = vadd.f32 0.0, %v1397
    %1399 = vmatmul.f32.gmra.mxu0 %v1372
    %v1400 = vpop.f32.mrf.mxu0
    %v1401 = vadd.f32 0.0, %v1400
    %1402 = vmatmul.f32.gmra.mxu0 %v1375
    %v1403 = vpop.f32.mrf.mxu0
    %v1404 = vadd.f32 0.0, %v1403
    %1405 = vdwg.mxu0
    %1407 = vset.pattern.permute.xlu0 0
    %1408 = vperm.xlu0 %1407, %v1361
    %v1409 = vpop.permute.xlu0 %1408
    %1412 = vset.pattern.permute.xlu0 0
    %1413 = vperm.xlu0 %1412, %v1362
    %v1414 = vpop.permute.xlu0 %1413
    %1417 = vset.pattern.permute.xlu0 0
    %1418 = vperm.xlu0 %1417, %v1363
    %v1419 = vpop.permute.xlu0 %1418
    %1422 = vset.pattern.permute.xlu0 0
    %1423 = vperm.xlu0 %1422, %v1364
    %v1424 = vpop.permute.xlu0 %1423
    %v1426 = vmul.f32 %v1409, %v1395
    %v1427 = vmul.f32 %v1414, %v1398
    %v1428 = vmul.f32 %v1419, %v1401
    %v1429 = vmul.f32 %v1424, %v1404
    %s1430 = scalar_lea.vmem %s6, 32
    %v1431 = vld [vmem:[%s1430] sm:$0xff]
    %v1432 = vld [vmem:[%s1430 + $0x8] sm:$0xff]
    %v1433 = vld [vmem:[%s1430 + $0x10] sm:$0xff]
    %v1434 = vld [vmem:[%s1430 + $0x18] sm:$0xff]
    %1436 = vset.pattern.permute.xlu0 0
    %1437 = vperm.xlu0 %1436, %v1431
    %v1438 = vpop.permute.xlu0 %1437
    %1441 = vset.pattern.permute.xlu0 0
    %1442 = vperm.xlu0 %1441, %v1432
    %v1443 = vpop.permute.xlu0 %1442
    %1446 = vset.pattern.permute.xlu0 0
    %1447 = vperm.xlu0 %1446, %v1433
    %v1448 = vpop.permute.xlu0 %1447
    %1451 = vset.pattern.permute.xlu0 0
    %1452 = vperm.xlu0 %1451, %v1434
    %v1453 = vpop.permute.xlu0 %1452
    %v1455 = vmul.f32 %v1438, %v1338
    %v1456 = vmul.f32 %v1443, %v1341
    %v1457 = vmul.f32 %v1448, %v1344
    %v1458 = vmul.f32 %v1453, %v1347
    %v1459 = vadd.f32 %v1426, %v1455
    %v1460 = vadd.f32 %v1427, %v1456
    %v1461 = vadd.f32 %v1428, %v1457
    %v1462 = vadd.f32 %v1429, %v1458
    %s1463 = scalar_lea.vmem %s6, 64
    %v1464 = vld [vmem:[%s1463] sm:$0xff]
    %v1465 = vld [vmem:[%s1463 + $0x8] sm:$0xff]
    %v1466 = vld [vmem:[%s1463 + $0x10] sm:$0xff]
    %v1467 = vld [vmem:[%s1463 + $0x18] sm:$0xff]
    %1468 = vmatpush.msra.mxu0 0.0
    %1469 = vmatpush.msra.mxu0 0.0
    %1470 = vmatpush.msra.mxu0 0.0
    %1471 = vmatpush.msra.mxu0 0.0
    %1472 = vmatpush.msra.mxu0 0.0
    %1473 = vmatpush.msra.mxu0 0.0
    %1474 = vmatpush.msra.mxu0 0.0
    %1475 = vmatpush.msra.mxu0 0.0
    %1476 = vmatpush.msra.mxu0 0.0
    %1477 = vmatpush.msra.mxu0 0.0
    %1478 = vmatpush.msra.mxu0 0.0
    %1479 = vmatpush.msra.mxu0 0.0
    %1480 = vmatpush.msra.mxu0 0.0
    %1481 = vmatpush.msra.mxu0 0.0
    %1482 = vmatpush.msra.mxu0 %v1360
    %1483 = vmatpush.msra.mxu0 %v1359
    %1484 = vmatmul.f32.gmra.mxu0 %v1366
    %v1485 = vpop.f32.mrf.mxu0
    %v1486 = vadd.f32 0.0, %v1485
    %1487 = vmatmul.f32.gmra.mxu0 %v1369
    %v1488 = vpop.f32.mrf.mxu0
    %v1489 = vadd.f32 0.0, %v1488
    %1490 = vmatmul.f32.gmra.mxu0 %v1372
    %v1491 = vpop.f32.mrf.mxu0
    %v1492 = vadd.f32 0.0, %v1491
    %1493 = vmatmul.f32.gmra.mxu0 %v1375
    %v1494 = vpop.f32.mrf.mxu0
    %v1495 = vadd.f32 0.0, %v1494
    %1496 = vdwg.mxu0
    %1498 = vset.pattern.permute.xlu0 0
    %1499 = vperm.xlu0 %1498, %v1464
    %v1500 = vpop.permute.xlu0 %1499
    %1503 = vset.pattern.permute.xlu0 0
    %1504 = vperm.xlu0 %1503, %v1465
    %v1505 = vpop.permute.xlu0 %1504
    %1508 = vset.pattern.permute.xlu0 0
    %1509 = vperm.xlu0 %1508, %v1466
    %v1510 = vpop.permute.xlu0 %1509
    %1513 = vset.pattern.permute.xlu0 0
    %1514 = vperm.xlu0 %1513, %v1467
    %v1515 = vpop.permute.xlu0 %1514
    %v1517 = vmul.f32 %v1500, %v1486
    %v1518 = vmul.f32 %v1505, %v1489
    %v1519 = vmul.f32 %v1510, %v1492
    %v1520 = vmul.f32 %v1515, %v1495
    %v1521 = vadd.f32 %v1459, %v1517
    %v1522 = vadd.f32 %v1460, %v1518
    %v1523 = vadd.f32 %v1461, %v1519
    %v1524 = vadd.f32 %v1462, %v1520
    %v1525 = vld [vmem:[%s7] sm:$0xff]
    %v1526 = vld [vmem:[%s7 + $0x8] sm:$0xff]
    %v1527 = vld [vmem:[%s7 + $0x10] sm:$0xff]
    %v1528 = vld [vmem:[%s7 + $0x18] sm:$0xff]
    %1530 = vset.pattern.permute.xlu0 0
    %1531 = vperm.xlu0 %1530, %v1525
    %v1532 = vpop.permute.xlu0 %1531
    %1535 = vset.pattern.permute.xlu0 0
    %1536 = vperm.xlu0 %1535, %v1526
    %v1537 = vpop.permute.xlu0 %1536
    %1540 = vset.pattern.permute.xlu0 0
    %1541 = vperm.xlu0 %1540, %v1527
    %v1542 = vpop.permute.xlu0 %1541
    %1545 = vset.pattern.permute.xlu0 0
    %1546 = vperm.xlu0 %1545, %v1528
    %v1547 = vpop.permute.xlu0 %1546
    %v1549 = vadd.f32 %v1521, %v1532
    %v1550 = vadd.f32 %v1522, %v1537
    %v1551 = vadd.f32 %v1523, %v1542
    %v1552 = vadd.f32 %v1524, %v1547
    %v1553 = vxor.u32 %v1549, 2147483648
    %v1554 = vxor.u32 %v1550, 2147483648
    %v1555 = vxor.u32 %v1551, 2147483648
    %v1556 = vxor.u32 %v1552, 2147483648
    %v1557 = vmul.f32 %v1553, 1.442695
    %v1558 = vpow.pop %v1557
    %v1559 = vmul.f32 %v1554, 1.442695
    %v1560 = vpow.pop %v1559
    %v1561 = vmul.f32 %v1555, 1.442695
    %v1562 = vpow.pop %v1561
    %v1563 = vmul.f32 %v1556, 1.442695
    %v1564 = vpow.pop %v1563
    %v1565 = vadd.f32 %v1558, 1.0
    %v1566 = vadd.f32 %v1560, 1.0
    %v1567 = vadd.f32 %v1562, 1.0
    %v1568 = vadd.f32 %v1564, 1.0
    %v1569 = vrcp.pop %v1565
    %v1570 = vmul.f32 %v1565, %v1569
    %v1571 = vsub.f32 1.0, %v1570
    %v1572 = vmul.f32 %v1569, %v1571
    %v1573 = vadd.f32 %v1569, %v1572
    %vm1574 = vweird.f32 %v1565
    %vm1575 = vweird.f32 %v1569
    %vm1576 = vmor %vm1574, %vm1575
    %v1577 = vsel %vm1576, %v1569, %v1573
    %v1578 = vand.u32 2147483647, %v1565
    %vm1579 = vcmp.eq.f32.partialorder %v1578, 8.507059e+37
    %v1580 = vand.u32 %v1565, 2147483648
    %v1581 = vor.u32 1.1754944e-38, %v1580
    %v1582 = vsel %vm1579, %v1581, %v1577
    %v1583 = vmul.f32 1.0, %v1582
    %v1584 = vrcp.pop %v1566
    %v1585 = vmul.f32 %v1566, %v1584
    %v1586 = vsub.f32 1.0, %v1585
    %v1587 = vmul.f32 %v1584, %v1586
    %v1588 = vadd.f32 %v1584, %v1587
    %vm1589 = vweird.f32 %v1566
    %vm1590 = vweird.f32 %v1584
    %vm1591 = vmor %vm1589, %vm1590
    %v1592 = vsel %vm1591, %v1584, %v1588
    %v1593 = vand.u32 2147483647, %v1566
    %vm1594 = vcmp.eq.f32.partialorder %v1593, 8.507059e+37
    %v1595 = vand.u32 %v1566, 2147483648
    %v1596 = vor.u32 1.1754944e-38, %v1595
    %v1597 = vsel %vm1594, %v1596, %v1592
    %v1598 = vmul.f32 1.0, %v1597
    %v1599 = vrcp.pop %v1567
    %v1600 = vmul.f32 %v1567, %v1599
    %v1601 = vsub.f32 1.0, %v1600
    %v1602 = vmul.f32 %v1599, %v1601
    %v1603 = vadd.f32 %v1599, %v1602
    %vm1604 = vweird.f32 %v1567
    %vm1605 = vweird.f32 %v1599
    %vm1606 = vmor %vm1604, %vm1605
    %v1607 = vsel %vm1606, %v1599, %v1603
    %v1608 = vand.u32 2147483647, %v1567
    %vm1609 = vcmp.eq.f32.partialorder %v1608, 8.507059e+37
    %v1610 = vand.u32 %v1567, 2147483648
    %v1611 = vor.u32 1.1754944e-38, %v1610
    %v1612 = vsel %vm1609, %v1611, %v1607
    %v1613 = vmul.f32 1.0, %v1612
    %v1614 = vrcp.pop %v1568
    %v1615 = vmul.f32 %v1568, %v1614
    %v1616 = vsub.f32 1.0, %v1615
    %v1617 = vmul.f32 %v1614, %v1616
    %v1618 = vadd.f32 %v1614, %v1617
    %vm1619 = vweird.f32 %v1568
    %vm1620 = vweird.f32 %v1614
    %vm1621 = vmor %vm1619, %vm1620
    %v1622 = vsel %vm1621, %v1614, %v1618
    %v1623 = vand.u32 2147483647, %v1568
    %vm1624 = vcmp.eq.f32.partialorder %v1623, 8.507059e+37
    %v1625 = vand.u32 %v1568, 2147483648
    %v1626 = vor.u32 1.1754944e-38, %v1625
    %v1627 = vsel %vm1624, %v1626, %v1622
    %v1628 = vmul.f32 1.0, %v1627
    %v1629 = vmul.f32 %v1549, %v1583
    %v1630 = vmul.f32 %v1550, %v1598
    %v1631 = vmul.f32 %v1551, %v1613
    %v1632 = vmul.f32 %v1552, %v1628
    %v1633 = vld [vmem:[%s8] sm:$0xff]
    %v1634 = vld [vmem:[%s8 + $0x8] sm:$0xff]
    %v1635 = vld [vmem:[%s8 + $0x10] sm:$0xff]
    %v1636 = vld [vmem:[%s8 + $0x18] sm:$0xff]
    %v1638 = vsel %vm492, %v1633, 0
    %v1641 = vsel %vm492, %v1634, 0
    %v1644 = vsel %vm492, %v1635, 0
    %v1647 = vsel %vm492, %v1636, 0
    %1649 = vmatpush.msra.mxu0 0.0
    %1650 = vmatpush.msra.mxu0 0.0
    %1651 = vmatpush.msra.mxu0 0.0
    %1652 = vmatpush.msra.mxu0 0.0
    %1653 = vmatpush.msra.mxu0 0.0
    %1654 = vmatpush.msra.mxu0 0.0
    %1655 = vmatpush.msra.mxu0 0.0
    %1656 = vmatpush.msra.mxu0 0.0
    %1657 = vmatpush.msra.mxu0 0.0
    %1658 = vmatpush.msra.mxu0 0.0
    %1659 = vmatpush.msra.mxu0 0.0
    %1660 = vmatpush.msra.mxu0 0.0
    %1661 = vmatpush.msra.mxu0 %v1632
    %1662 = vmatpush.msra.mxu0 %v1631
    %1663 = vmatpush.msra.mxu0 %v1630
    %1664 = vmatpush.msra.mxu0 %v1629
    %1665 = vmatmul.f32.gmra.mxu0 %v1638
    %v1666 = vpop.f32.mrf.mxu0
    %v1667 = vadd.f32 0.0, %v1666
    %1668 = vmatmul.f32.gmra.mxu0 %v1641
    %v1669 = vpop.f32.mrf.mxu0
    %v1670 = vadd.f32 0.0, %v1669
    %1671 = vmatmul.f32.gmra.mxu0 %v1644
    %v1672 = vpop.f32.mrf.mxu0
    %v1673 = vadd.f32 0.0, %v1672
    %1674 = vmatmul.f32.gmra.mxu0 %v1647
    %v1675 = vpop.f32.mrf.mxu0
    %v1676 = vadd.f32 0.0, %v1675
    %1677 = vdwg.mxu0
    %vm1678 = vcmp.eq.s32.totalorder %v168, 0
    %vm1679 = vcmp.eq.s32.totalorder %v169, 0
    %vm1680 = vcmp.eq.s32.totalorder %v170, 0
    %vm1681 = vcmp.eq.s32.totalorder %v171, 0
    %vm1682 = vmor %vm1678, %vm208
    %vm1683 = vmor %vm1679, %vm209
    %vm1684 = vmor %vm1680, %vm210
    %vm1685 = vmor %vm1681, %vm211
    %vm1686 = vcmp.eq.s32.totalorder %v168, 32
    %vm1687 = vcmp.eq.s32.totalorder %v169, 32
    %vm1688 = vcmp.eq.s32.totalorder %v170, 32
    %vm1689 = vcmp.eq.s32.totalorder %v171, 32
    %vm1690 = vmor %vm1682, %vm1686
    %vm1691 = vmor %vm1683, %vm1687
    %vm1692 = vmor %vm1684, %vm1688
    %vm1693 = vmor %vm1685, %vm1689
    %vm1694 = vcmp.eq.s32.totalorder %v168, 48
    %vm1695 = vcmp.eq.s32.totalorder %v169, 48
    %vm1696 = vcmp.eq.s32.totalorder %v170, 48
    %vm1697 = vcmp.eq.s32.totalorder %v171, 48
    %vm1698 = vmor %vm1690, %vm1694
    %vm1699 = vmor %vm1691, %vm1695
    %vm1700 = vmor %vm1692, %vm1696
    %vm1701 = vmor %vm1693, %vm1697
    %vm1702 = vcmp.eq.s32.totalorder %v168, 64
    %vm1703 = vcmp.eq.s32.totalorder %v169, 64
    %vm1704 = vcmp.eq.s32.totalorder %v170, 64
    %vm1705 = vcmp.eq.s32.totalorder %v171, 64
    %vm1706 = vmor %vm1698, %vm1702
    %vm1707 = vmor %vm1699, %vm1703
    %vm1708 = vmor %vm1700, %vm1704
    %vm1709 = vmor %vm1701, %vm1705
    %vm1710 = vcmp.eq.s32.totalorder %v168, 80
    %vm1711 = vcmp.eq.s32.totalorder %v169, 80
    %vm1712 = vcmp.eq.s32.totalorder %v170, 80
    %vm1713 = vcmp.eq.s32.totalorder %v171, 80
    %vm1714 = vmor %vm1706, %vm1710
    %vm1715 = vmor %vm1707, %vm1711
    %vm1716 = vmor %vm1708, %vm1712
    %vm1717 = vmor %vm1709, %vm1713
    %vm1718 = vcmp.eq.s32.totalorder %v168, 96
    %vm1719 = vcmp.eq.s32.totalorder %v169, 96
    %vm1720 = vcmp.eq.s32.totalorder %v170, 96
    %vm1721 = vcmp.eq.s32.totalorder %v171, 96
    %vm1722 = vmor %vm1714, %vm1718
    %vm1723 = vmor %vm1715, %vm1719
    %vm1724 = vmor %vm1716, %vm1720
    %vm1725 = vmor %vm1717, %vm1721
    %vm1726 = vcmp.eq.s32.totalorder %v168, 112
    %vm1727 = vcmp.eq.s32.totalorder %v169, 112
    %vm1728 = vcmp.eq.s32.totalorder %v170, 112
    %vm1729 = vcmp.eq.s32.totalorder %v171, 112
    %vm1730 = vmor %vm1722, %vm1726
    %vm1731 = vmor %vm1723, %vm1727
    %vm1732 = vmor %vm1724, %vm1728
    %vm1733 = vmor %vm1725, %vm1729
    %vm1734 = vcmp.eq.s32.totalorder %v168, 128
    %vm1735 = vcmp.eq.s32.totalorder %v169, 128
    %vm1736 = vcmp.eq.s32.totalorder %v170, 128
    %vm1737 = vcmp.eq.s32.totalorder %v171, 128
    %vm1738 = vmor %vm1730, %vm1734
    %vm1739 = vmor %vm1731, %vm1735
    %vm1740 = vmor %vm1732, %vm1736
    %vm1741 = vmor %vm1733, %vm1737
    %vm1742 = vcmp.eq.s32.totalorder %v168, 144
    %vm1743 = vcmp.eq.s32.totalorder %v169, 144
    %vm1744 = vcmp.eq.s32.totalorder %v170, 144
    %vm1745 = vcmp.eq.s32.totalorder %v171, 144
    %vm1746 = vmor %vm1738, %vm1742
    %vm1747 = vmor %vm1739, %vm1743
    %vm1748 = vmor %vm1740, %vm1744
    %vm1749 = vmor %vm1741, %vm1745
    %v1750 = vsel %vm1746, 1, 0
    %v1751 = vsel %vm1747, 1, 0
    %v1752 = vsel %vm1748, 1, 0
    %v1753 = vsel %vm1749, 1, 0
    %v1754 = vcvt.s32.f32 %v1750
    %v1755 = vcvt.s32.f32 %v1751
    %v1756 = vcvt.s32.f32 %v1752
    %v1757 = vcvt.s32.f32 %v1753
    %v1759 = vsel %vm65, %v1667, 0
    %v1762 = vsel %vm65, %v1670, 0
    %v1765 = vsel %vm65, %v1673, 0
    %v1768 = vsel %vm65, %v1676, 0
    %1770 = vmatpush.msra.mxu0 0.0
    %1771 = vmatpush.msra.mxu0 0.0
    %1772 = vmatpush.msra.mxu0 0.0
    %1773 = vmatpush.msra.mxu0 0.0
    %1774 = vmatpush.msra.mxu0 0.0
    %1775 = vmatpush.msra.mxu0 0.0
    %1776 = vmatpush.msra.mxu0 0.0
    %1777 = vmatpush.msra.mxu0 0.0
    %1778 = vmatpush.msra.mxu0 0.0
    %1779 = vmatpush.msra.mxu0 0.0
    %1780 = vmatpush.msra.mxu0 0.0
    %1781 = vmatpush.msra.mxu0 0.0
    %1782 = vmatpush.msra.mxu0 0.0
    %1783 = vmatpush.msra.mxu0 0.0
    %1784 = vmatpush.msra.mxu0 %v1756
    %1785 = vmatpush.msra.mxu0 %v1754
    %1786 = vmatmul.f32.gmra.mxu0 %v1759
    %v1787 = vpop.f32.mrf.mxu0
    %v1788 = vadd.f32 0.0, %v1787
    %1789 = vmatmul.f32.gmra.mxu0 %v1762
    %v1790 = vpop.f32.mrf.mxu0
    %v1791 = vadd.f32 0.0, %v1790
    %1792 = vmatmul.f32.gmra.mxu0 %v1765
    %v1793 = vpop.f32.mrf.mxu0
    %v1794 = vadd.f32 0.0, %v1793
    %1795 = vmatmul.f32.gmra.mxu0 %v1768
    %v1796 = vpop.f32.mrf.mxu0
    %v1797 = vadd.f32 0.0, %v1796
    %1798 = vdwg.mxu0
    %1799 = vmatpush.msra.mxu0 0.0
    %1800 = vmatpush.msra.mxu0 0.0
    %1801 = vmatpush.msra.mxu0 0.0
    %1802 = vmatpush.msra.mxu0 0.0
    %1803 = vmatpush.msra.mxu0 0.0
    %1804 = vmatpush.msra.mxu0 0.0
    %1805 = vmatpush.msra.mxu0 0.0
    %1806 = vmatpush.msra.mxu0 0.0
    %1807 = vmatpush.msra.mxu0 0.0
    %1808 = vmatpush.msra.mxu0 0.0
    %1809 = vmatpush.msra.mxu0 0.0
    %1810 = vmatpush.msra.mxu0 0.0
    %1811 = vmatpush.msra.mxu0 0.0
    %1812 = vmatpush.msra.mxu0 0.0
    %1813 = vmatpush.msra.mxu0 %v1757
    %1814 = vmatpush.msra.mxu0 %v1755
    %1815 = vmatmul.f32.gmra.mxu0 %v1759
    %v1816 = vpop.f32.mrf.mxu0
    %v1817 = vadd.f32 0.0, %v1816
    %1818 = vmatmul.f32.gmra.mxu0 %v1762
    %v1819 = vpop.f32.mrf.mxu0
    %v1820 = vadd.f32 0.0, %v1819
    %1821 = vmatmul.f32.gmra.mxu0 %v1765
    %v1822 = vpop.f32.mrf.mxu0
    %v1823 = vadd.f32 0.0, %v1822
    %1824 = vmatmul.f32.gmra.mxu0 %v1768
    %v1825 = vpop.f32.mrf.mxu0
    %v1826 = vadd.f32 0.0, %v1825
    %1827 = vdwg.mxu0
    %v1828 = vadd.f32 %v871, %v1788
    %v1829 = vadd.f32 %v872, %v1817
    %v1830 = vadd.f32 %v873, %v1791
    %v1831 = vadd.f32 %v874, %v1820
    %v1832 = vadd.f32 %v875, %v1794
    %v1833 = vadd.f32 %v876, %v1823
    %v1834 = vadd.f32 %v877, %v1797
    %v1835 = vadd.f32 %v878, %v1826
    %v1836 = vmax.f32 %v1828, 0.0
    %v1837 = vmax.f32 %v1829, 0.0
    %v1838 = vmax.f32 %v1830, 0.0
    %v1839 = vmax.f32 %v1831, 0.0
    %v1840 = vmax.f32 %v1832, 0.0
    %v1841 = vmax.f32 %v1833, 0.0
    %v1842 = vmax.f32 %v1834, 0.0
    %v1843 = vmax.f32 %v1835, 0.0
    %1844 = vst [vmem:[#allocation2] sm:$0xff] %v1836
    %1845 = vst.msk [vmem:[#allocation2 + $0x8] sm:$0xff] %vm492, %v1837
    %1846 = vst [vmem:[#allocation2 + $0x10] sm:$0xff] %v1838
    %1847 = vst.msk [vmem:[#allocation2 + $0x18] sm:$0xff] %vm492, %v1839
    %1848 = vst [vmem:[#allocation2 + $0x20] sm:$0xff] %v1840
    %1849 = vst.msk [vmem:[#allocation2 + $0x28] sm:$0xff] %vm492, %v1841
    %1850 = vst [vmem:[#allocation2 + $0x30] sm:$0xff] %v1842
    %1851 = vst.msk [vmem:[#allocation2 + $0x38] sm:$0xff] %vm492, %v1843
    // Predicated region
    $region38: #{tpu_custom_call.1} parent=1 // pred_check
      _
    $region39: #{tpu_custom_call.1} parent=1 // pred_check_branch
      %1853 = sbr.rel (0) target = $region41
    $region40: #{tpu_custom_call.1} parent=1 // pred_region
      %1855 = vsyncadd [#allocation3], 0
      %s1856 = sshll.u32 [#allocation2], 4
      %s1857 = int_to_ptr.vmem [resolvable:$true] %s1856
      %s1858 = sshll.u32 %s9, 4
      %s1859 = int_to_ptr.hbm [resolvable:$true] %s1858
      %1864 = dma.vmem_to_hbm [thread:$0]  %s1857, 1024, %s1859, [#allocation3], 256, 256, 16
    $region41: #{tpu_custom_call.1} parent=1 // pred_fallthru
      _
    // Predicated region
    $region42: #{tpu_custom_call.1} parent=1 // pred_check
      _
    $region43: #{tpu_custom_call.1} parent=1 // pred_check_branch
      %1866 = sbr.rel (0) target = $region45
    $region44: #{tpu_custom_call.1} parent=1 // pred_region
      %1868 = dma.done [#allocation3], 1024
    $region45: #{tpu_custom_call.1} parent=1 // pred_fallthru
      _
    %1869 = vsyncpa [#allocation3], 1

</llo_original>
